<compile_context>
chip_gen: v7x
topology: tpu7x:2x2x1
jax: 0.10.0
libtpu: 0.0.40
codegen_flags: <defaults>
</compile_context>

<pallas_src>
import functools

import jax
import jax.numpy as jnp
import numpy as np
from jax.experimental import pallas as pl
from jax.experimental.pallas import tpu as pltpu


# ----------------------------- fused Pallas kernel --------------------------


def fused_transformer_kernel(x_ref, wA_ref, w2_ref, bias_ref, masksel_ref,
                             head_ref, out_ref, *, unroll):
    LB, D = x_ref.shape                 # LB = L * B, row r = l*B + b
    num_layers = wA_ref.shape[0]
    scale = 1.0 / float(D) ** 0.5

    def layernorm(z, gamma, beta):
        # Fused reductions: E[z] and E[z^2] are independent (one pass),
        # var = E[z^2] - E[z]^2; rsqrt goes to the EUP.
        mu = jnp.mean(z, axis=-1, keepdims=True)
        ms = jnp.mean(z * z, axis=-1, keepdims=True)
        var = ms - mu * mu
        return (z - mu) * jax.lax.rsqrt(var + 1e-5) * gamma + beta

    def reciprocal(s):
        # EUP approximate reciprocal + one Newton-Raphson step on the VPU.
        y = pl.reciprocal(s, approx=True)
        return y * (2.0 - s * y)

    def layer_body(i, x):               # x: (LB, D) f32 carried in vregs
        wA = wA_ref[i]                   # (D, 8D) bf16: [Wqkv | Wo | W1]
        w2 = w2_ref[i]                   # (4D, D) bf16
        b = bias_ref[i]                  # (1, 11D) f32
        bqkv = b[:, :3 * D]
        bo = b[:, 3 * D:4 * D]
        gamma = b[:, 4 * D:5 * D]
        beta = b[:, 5 * D:6 * D]
        b1 = b[:, 6 * D:10 * D]
        b2 = b[:, 10 * D:]

        # --- self-attention (num_heads = 1), packed QKV: one matmul ---
        xb = x.astype(jnp.bfloat16)
        qkv = jnp.dot(xb, wA[:, :3 * D],
                      preferred_element_type=jnp.float32) + bqkv
        q = qkv[:, :D]
        k = qkv[:, D:2 * D]
        v = qkv[:, 2 * D:]

        # Additive block-diagonal bias (0 where same l, -1e30 otherwise),
        # precomputed in the wrapper: no in-kernel iota / div / select.
        scores = jax.lax.dot_general(
            q.astype(jnp.bfloat16), k.astype(jnp.bfloat16),
            (((1,), (1,)), ((), ())),
            preferred_element_type=jnp.float32) * scale + masksel_ref[:LB, :]
        scores = scores - jnp.max(scores, axis=-1, keepdims=True)
        p = jnp.exp(scores)
        p = p * reciprocal(jnp.sum(p, axis=-1, keepdims=True))
        attn = jnp.dot(p.astype(jnp.bfloat16), v.astype(jnp.bfloat16),
                       preferred_element_type=jnp.float32)
        attn_out = jnp.dot(attn.astype(jnp.bfloat16), wA[:, 3 * D:4 * D],
                           preferred_element_type=jnp.float32) + bo
        h = layernorm(x + attn_out, gamma, beta)

        # --- feed-forward ---
        ff = jnp.dot(h.astype(jnp.bfloat16), wA[:, 4 * D:],
                     preferred_element_type=jnp.float32) + b1
        ff = jnp.maximum(ff, 0.0)
        ff = jnp.dot(ff.astype(jnp.bfloat16), w2,
                     preferred_element_type=jnp.float32) + b2
        return layernorm(h + ff, gamma, beta)

    h = jax.lax.fori_loop(0, num_layers, layer_body, x_ref[...], unroll=unroll)

    # --- head: sum over L (selection-matrix matmul), then fc ---
    # Kept in f32: the L-sum is the precision-sensitive reduction and both
    # matmuls are a single tiny MXU pass.
    sel = masksel_ref[LB:, :]                                   # (B, LB)
    s = jnp.dot(sel, h, preferred_element_type=jnp.float32)     # (B, D)
    out = jnp.dot(s, head_ref[:D, :],
                  preferred_element_type=jnp.float32) + head_ref[D:, :]
    out_ref[...] = out.astype(out_ref.dtype)


# ------------------------------ wrapper --------------------------------------


def pack_params(layers):
    # Pack per-layer params into three slabs (weights bf16, biases/LN f32),
    # pre-transposed to (Din, Dout) so the kernel does plain x @ w.
    wA, w2, bias = [], [], []
    for p in layers:
        wA.append(jnp.concatenate(
            [p['wq'].T, p['wk'].T, p['wv'].T, p['wo'].T, p['w1'].T], axis=1))
        w2.append(p['w2'].T)
        bias.append(jnp.concatenate(
            [p['bq'], p['bk'], p['bv'], p['bo'], p['gamma'], p['beta'],
             p['b1'], p['b2']], axis=1))
    return (jnp.stack(wA).astype(jnp.bfloat16),    # (NL, D, 8D)
            jnp.stack(w2).astype(jnp.bfloat16),    # (NL, 4D, D)
            jnp.stack(bias).astype(jnp.float32))   # (NL, 1, 11D)


def transformer_network_forward(x_in, layers, wfc, bfc):
    # x_in: (B, D, L) as in the PyTorch module.
    B, D, L = x_in.shape
    O = wfc.shape[0]
    LB = L * B
    num_layers = len(layers)

    # (B, D, L) -> (L, B, D) -> (L*B, D); row r = l*B + b.  Done in XLA.
    x2d = jnp.transpose(x_in, (2, 0, 1)).reshape(LB, D).astype(jnp.float32)

    wA, w2, bias = pack_params(layers)
    head = jnp.concatenate([wfc.T, bfc], axis=0).astype(jnp.float32)  # (D+1, O)

    # Hoisted constants: additive block-diagonal attention bias and the
    # sum-over-L selection matrix, concatenated into one slab (one DMA).
    lid = jnp.arange(LB, dtype=jnp.int32) // B
    mask = jnp.where(lid[:, None] == lid[None, :],
                     jnp.float32(0.0), jnp.float32(-1e30))        # (LB, LB)
    sel = (jnp.arange(LB, dtype=jnp.int32)[None, :] % B ==
           jnp.arange(B, dtype=jnp.int32)[:, None]).astype(jnp.float32)  # (B, LB)
    masksel = jnp.concatenate([mask, sel], axis=0)                # (LB+B, LB)

    kernel = functools.partial(fused_transformer_kernel,
                               unroll=num_layers <= 4)
    vmem = pl.BlockSpec(memory_space=pltpu.MemorySpace.VMEM)

    return pl.pallas_call(
        kernel,
        out_shape=jax.ShapeDtypeStruct((B, O), jnp.float32),
        in_specs=[vmem] * 6,
        out_specs=vmem,
    )(x2d, wA, w2, bias, masksel, head)


# --------------------------- pure-JAX reference -----------------------------


def _ln_ref(z, g, b):
    mu = jnp.mean(z, axis=-1, keepdims=True)
    var = jnp.mean((z - mu) ** 2, axis=-1, keepdims=True)
    return (z - mu) / jnp.sqrt(var + 1e-5) * g + b


def reference_forward(x_in, layers, wfc, bfc):
    x = jnp.transpose(x_in, (0, 2, 1))           # (B, L, D) == x.permute(0,2,1)
    D = x.shape[-1]
    for p in layers:
        q = x @ p['wq'].T + p['bq']
        k = x @ p['wk'].T + p['bk']
        v = x @ p['wv'].T + p['bv']
        # batch_first=False MHA: dim0 (B) is the sequence, dim1 (L) the batch
        scores = jnp.einsum('ild,jld->lij', q, k) / jnp.sqrt(jnp.float32(D))
        w = jax.nn.softmax(scores, axis=-1)
        attn = jnp.einsum('lij,jld->ild', w, v)
        attn_out = attn @ p['wo'].T + p['bo']
        x = _ln_ref(x + attn_out, p['gamma'], p['beta'])
        ff = jnp.maximum(x @ p['w1'].T + p['b1'], 0.0) @ p['w2'].T + p['b2']
        x = _ln_ref(x + ff, p['gamma'], p['beta'])
    s = x.sum(axis=1)
    return s @ wfc.T + bfc


# ------------------------------ params init ---------------------------------


def _uniform(key, shape, fan_in):
    bound = 1.0 / (fan_in ** 0.5)
    return jax.random.uniform(key, shape, jnp.float32, -bound, bound)


def init_params(key, D, O, num_layers):
    # TODO(synk): does not replicate nn.MultiheadAttention's xavier_uniform /
    # zero-bias in_proj init; only the forward math matters here.
    H = 4 * D
    layers = []
    for i in range(num_layers):
        ks = jax.random.split(jax.random.fold_in(key, i), 14)
        layers.append({
            'wq': _uniform(ks[0], (D, D), D), 'bq': _uniform(ks[1], (1, D), D),
            'wk': _uniform(ks[2], (D, D), D), 'bk': _uniform(ks[3], (1, D), D),
            'wv': _uniform(ks[4], (D, D), D), 'bv': _uniform(ks[5], (1, D), D),
            'wo': _uniform(ks[6], (D, D), D), 'bo': _uniform(ks[7], (1, D), D),
            'gamma': 1.0 + 0.1 * jax.random.normal(ks[8], (1, D), jnp.float32),
            'beta': 0.1 * jax.random.normal(ks[9], (1, D), jnp.float32),
            'w1': _uniform(ks[10], (H, D), D), 'b1': _uniform(ks[11], (1, H), D),
            'w2': _uniform(ks[12], (D, H), H), 'b2': _uniform(ks[13], (1, D), H),
        })
    kfc_w, kfc_b = jax.random.split(jax.random.fold_in(key, 10_000))
    wfc = _uniform(kfc_w, (O, D), D)
    bfc = _uniform(kfc_b, (1, O), D)
    return layers, wfc, bfc


# --------------------------------- main --------------------------------------


if __name__ == "__main__":
    B, D, L = 4, 8, 16          # batch, input_dim, seq
    O = 5                       # output_dim
    NUM_LAYERS = 2

    key = jax.random.PRNGKey(0)
    kx, kp = jax.random.split(key)
    x_in = jax.random.normal(kx, (B, D, L), jnp.float32)   # PyTorch (B, C, L)
    layers, wfc, bfc = init_params(kp, D, O, NUM_LAYERS)

    fwd = jax.jit(transformer_network_forward)
    out = jax.block_until_ready(fwd(x_in, layers, wfc, bfc))

    ref = jax.block_until_ready(reference_forward(x_in, layers, wfc, bfc))

    # bf16 MXU operands dominate the numeric error (~1% relative through the
    # 2-layer stack vs the f32 reference); check against a tolerance scaled
    # to the output magnitude.  The softmax reciprocal itself is exact to
    # ~1e-7 thanks to the Newton-Raphson refinement.
    out_np = np.asarray(out, dtype=np.float64)
    ref_np = np.asarray(ref, dtype=np.float64)
    scale = float(np.max(np.abs(ref_np)))
    np.testing.assert_allclose(out_np, ref_np, rtol=2e-2, atol=2e-2 * scale)
    print("KERNEL_OK")
</pallas_src>

<mosaic_0001>
module attributes {stable_mosaic.version = 11 : i64} {
  func.func @fused_transformer_kernel(%arg0: memref<64x8xf32, #tpu.memory_space<vmem>>, %arg1: memref<2x8x64xbf16, #tpu.memory_space<vmem>>, %arg2: memref<2x32x8xbf16, #tpu.memory_space<vmem>>, %arg3: memref<2x1x88xf32, #tpu.memory_space<vmem>>, %arg4: memref<68x64xf32, #tpu.memory_space<vmem>>, %arg5: memref<9x5xf32, #tpu.memory_space<vmem>>, %arg6: memref<4x5xf32, #tpu.memory_space<vmem>>) attributes {dimension_semantics = [], scalar_prefetch = 0 : i64, scratch_operands = 0 : i64, tpu.core_type = #tpu.core_type<tc>} {
    %c0 = arith.constant 0 : index
    %c0_0 = arith.constant 0 : index
    %0 = vector.load %arg0[%c0, %c0_0] : memref<64x8xf32, #tpu.memory_space<vmem>>, vector<64x8xf32>
    %c0_i32 = arith.constant 0 : i32
    %1 = arith.index_cast %c0_i32 : i32 to index
    %c0_1 = arith.constant 0 : index
    %c0_2 = arith.constant 0 : index
    %2 = vector.load %arg1[%1, %c0_1, %c0_2] : memref<2x8x64xbf16, #tpu.memory_space<vmem>>, vector<1x8x64xbf16>
    %3 = vector.shape_cast %2 : vector<1x8x64xbf16> to vector<8x64xbf16>
    %4 = arith.index_cast %c0_i32 : i32 to index
    %c0_3 = arith.constant 0 : index
    %c0_4 = arith.constant 0 : index
    %5 = vector.load %arg2[%4, %c0_3, %c0_4] : memref<2x32x8xbf16, #tpu.memory_space<vmem>>, vector<1x32x8xbf16>
    %6 = vector.shape_cast %5 : vector<1x32x8xbf16> to vector<32x8xbf16>
    %7 = arith.index_cast %c0_i32 : i32 to index
    %c0_5 = arith.constant 0 : index
    %c0_6 = arith.constant 0 : index
    %8 = vector.load %arg3[%7, %c0_5, %c0_6] : memref<2x1x88xf32, #tpu.memory_space<vmem>>, vector<1x1x88xf32>
    %9 = vector.shape_cast %8 : vector<1x1x88xf32> to vector<1x88xf32>
    %10 = vector.extract_strided_slice %9 {offsets = [0, 0], sizes = [1, 24], strides = [1, 1]} : vector<1x88xf32> to vector<1x24xf32>
    %11 = vector.extract_strided_slice %9 {offsets = [0, 24], sizes = [1, 8], strides = [1, 1]} : vector<1x88xf32> to vector<1x8xf32>
    %12 = vector.extract_strided_slice %9 {offsets = [0, 32], sizes = [1, 8], strides = [1, 1]} : vector<1x88xf32> to vector<1x8xf32>
    %13 = vector.extract_strided_slice %9 {offsets = [0, 40], sizes = [1, 8], strides = [1, 1]} : vector<1x88xf32> to vector<1x8xf32>
    %14 = vector.extract_strided_slice %9 {offsets = [0, 48], sizes = [1, 32], strides = [1, 1]} : vector<1x88xf32> to vector<1x32xf32>
    %15 = vector.extract_strided_slice %9 {offsets = [0, 80], sizes = [1, 8], strides = [1, 1]} : vector<1x88xf32> to vector<1x8xf32>
    %16 = arith.truncf %0 : vector<64x8xf32> to vector<64x8xbf16>
    %17 = vector.extract_strided_slice %3 {offsets = [0, 0], sizes = [8, 24], strides = [1, 1]} : vector<8x64xbf16> to vector<8x24xbf16>
    %cst = arith.constant dense<0.000000e+00> : vector<64x24xf32>
    %18 = tpu.matmul %16, %17, %cst {dimension_numbers = #tpu.dot_dimension_numbers<[1], [0], [0], [1], [0, 0, 1, 1], [], []>} : vector<64x8xbf16>, vector<8x24xbf16>, vector<64x24xf32> -> vector<64x24xf32>
    %19 = vector.broadcast %10 : vector<1x24xf32> to vector<64x24xf32>
    %20 = arith.addf %18, %19 : vector<64x24xf32>
    %21 = vector.extract_strided_slice %20 {offsets = [0, 0], sizes = [64, 8], strides = [1, 1]} : vector<64x24xf32> to vector<64x8xf32>
    %22 = vector.extract_strided_slice %20 {offsets = [0, 8], sizes = [64, 8], strides = [1, 1]} : vector<64x24xf32> to vector<64x8xf32>
    %23 = vector.extract_strided_slice %20 {offsets = [0, 16], sizes = [64, 8], strides = [1, 1]} : vector<64x24xf32> to vector<64x8xf32>
    %24 = arith.truncf %21 : vector<64x8xf32> to vector<64x8xbf16>
    %25 = arith.truncf %22 : vector<64x8xf32> to vector<64x8xbf16>
    %cst_7 = arith.constant dense<0.000000e+00> : vector<64x64xf32>
    %26 = tpu.matmul %24, %25, %cst_7 {dimension_numbers = #tpu.dot_dimension_numbers<[1], [1], [0], [0], [0, 0, 1, 0], [], []>} : vector<64x8xbf16>, vector<64x8xbf16>, vector<64x64xf32> -> vector<64x64xf32>
    %cst_8 = arith.constant 0.353553385 : f32
    %27 = vector.broadcast %cst_8 : f32 to vector<64x64xf32>
    %28 = arith.mulf %26, %27 : vector<64x64xf32>
    %c0_9 = arith.constant 0 : index
    %c0_10 = arith.constant 0 : index
    %29 = vector.load %arg4[%c0_9, %c0_10] : memref<68x64xf32, #tpu.memory_space<vmem>>, vector<64x64xf32>
    %30 = arith.addf %28, %29 : vector<64x64xf32>
    %cst_11 = arith.constant dense<0xFF800000> : vector<64xf32>
    %31 = vector.multi_reduction <maximumf>, %30, %cst_11 [1] : vector<64x64xf32> to vector<64xf32>
    %32 = vector.shape_cast %31 : vector<64xf32> to vector<64x1xf32>
    %33 = vector.broadcast %32 : vector<64x1xf32> to vector<64x64xf32>
    %34 = arith.subf %30, %33 : vector<64x64xf32>
    %35 = math.exp %34 : vector<64x64xf32>
    %cst_12 = arith.constant dense<0.000000e+00> : vector<64xf32>
    %36 = vector.multi_reduction <add>, %35, %cst_12 [1] : vector<64x64xf32> to vector<64xf32>
    %37 = vector.shape_cast %36 : vector<64xf32> to vector<64x1xf32>
    %38 = tpu.reciprocal %37 {approx = true} : vector<64x1xf32> -> vector<64x1xf32>
    %39 = arith.mulf %37, %38 : vector<64x1xf32>
    %cst_13 = arith.constant 2.000000e+00 : f32
    %40 = vector.broadcast %cst_13 : f32 to vector<64x1xf32>
    %41 = arith.subf %40, %39 : vector<64x1xf32>
    %42 = arith.mulf %38, %41 : vector<64x1xf32>
    %43 = vector.broadcast %42 : vector<64x1xf32> to vector<64x64xf32>
    %44 = arith.mulf %35, %43 : vector<64x64xf32>
    %45 = arith.truncf %44 : vector<64x64xf32> to vector<64x64xbf16>
    %46 = arith.truncf %23 : vector<64x8xf32> to vector<64x8xbf16>
    %cst_14 = arith.constant dense<0.000000e+00> : vector<64x8xf32>
    %47 = tpu.matmul %45, %46, %cst_14 {dimension_numbers = #tpu.dot_dimension_numbers<[1], [0], [0], [1], [0, 0, 1, 1], [], []>} : vector<64x64xbf16>, vector<64x8xbf16>, vector<64x8xf32> -> vector<64x8xf32>
    %48 = arith.truncf %47 : vector<64x8xf32> to vector<64x8xbf16>
    %49 = vector.extract_strided_slice %3 {offsets = [0, 24], sizes = [8, 8], strides = [1, 1]} : vector<8x64xbf16> to vector<8x8xbf16>
    %cst_15 = arith.constant dense<0.000000e+00> : vector<64x8xf32>
    %50 = tpu.matmul %48, %49, %cst_15 {dimension_numbers = #tpu.dot_dimension_numbers<[1], [0], [0], [1], [0, 0, 1, 1], [], []>} : vector<64x8xbf16>, vector<8x8xbf16>, vector<64x8xf32> -> vector<64x8xf32>
    %51 = vector.broadcast %11 : vector<1x8xf32> to vector<64x8xf32>
    %52 = arith.addf %50, %51 : vector<64x8xf32>
    %53 = arith.addf %0, %52 : vector<64x8xf32>
    %cst_16 = arith.constant dense<0.000000e+00> : vector<64xf32>
    %54 = vector.multi_reduction <add>, %53, %cst_16 [1] : vector<64x8xf32> to vector<64xf32>
    %55 = vector.shape_cast %54 : vector<64xf32> to vector<64x1xf32>
    %cst_17 = arith.constant 8.000000e+00 : f32
    %56 = vector.broadcast %cst_17 : f32 to vector<64x1xf32>
    %57 = arith.divf %55, %56 : vector<64x1xf32>
    %58 = arith.mulf %53, %53 : vector<64x8xf32>
    %cst_18 = arith.constant dense<0.000000e+00> : vector<64xf32>
    %59 = vector.multi_reduction <add>, %58, %cst_18 [1] : vector<64x8xf32> to vector<64xf32>
    %60 = vector.shape_cast %59 : vector<64xf32> to vector<64x1xf32>
    %cst_19 = arith.constant 8.000000e+00 : f32
    %61 = vector.broadcast %cst_19 : f32 to vector<64x1xf32>
    %62 = arith.divf %60, %61 : vector<64x1xf32>
    %63 = arith.mulf %57, %57 : vector<64x1xf32>
    %64 = arith.subf %62, %63 : vector<64x1xf32>
    %65 = vector.broadcast %57 : vector<64x1xf32> to vector<64x8xf32>
    %66 = arith.subf %53, %65 : vector<64x8xf32>
    %cst_20 = arith.constant 9.99999974E-6 : f32
    %67 = vector.broadcast %cst_20 : f32 to vector<64x1xf32>
    %68 = arith.addf %64, %67 : vector<64x1xf32>
    %69 = math.rsqrt %68 : vector<64x1xf32>
    %70 = vector.broadcast %69 : vector<64x1xf32> to vector<64x8xf32>
    %71 = arith.mulf %66, %70 : vector<64x8xf32>
    %72 = vector.broadcast %12 : vector<1x8xf32> to vector<64x8xf32>
    %73 = arith.mulf %71, %72 : vector<64x8xf32>
    %74 = vector.broadcast %13 : vector<1x8xf32> to vector<64x8xf32>
    %75 = arith.addf %73, %74 : vector<64x8xf32>
    %76 = arith.truncf %75 : vector<64x8xf32> to vector<64x8xbf16>
    %77 = vector.extract_strided_slice %3 {offsets = [0, 32], sizes = [8, 32], strides = [1, 1]} : vector<8x64xbf16> to vector<8x32xbf16>
    %cst_21 = arith.constant dense<0.000000e+00> : vector<64x32xf32>
    %78 = tpu.matmul %76, %77, %cst_21 {dimension_numbers = #tpu.dot_dimension_numbers<[1], [0], [0], [1], [0, 0, 1, 1], [], []>} : vector<64x8xbf16>, vector<8x32xbf16>, vector<64x32xf32> -> vector<64x32xf32>
    %79 = vector.broadcast %14 : vector<1x32xf32> to vector<64x32xf32>
    %80 = arith.addf %78, %79 : vector<64x32xf32>
    %cst_22 = arith.constant 0.000000e+00 : f32
    %81 = vector.broadcast %cst_22 : f32 to vector<64x32xf32>
    %82 = arith.maximumf %80, %81 : vector<64x32xf32>
    %83 = arith.truncf %82 : vector<64x32xf32> to vector<64x32xbf16>
    %cst_23 = arith.constant dense<0.000000e+00> : vector<64x8xf32>
    %84 = tpu.matmul %83, %6, %cst_23 {dimension_numbers = #tpu.dot_dimension_numbers<[1], [0], [0], [1], [0, 0, 1, 1], [], []>} : vector<64x32xbf16>, vector<32x8xbf16>, vector<64x8xf32> -> vector<64x8xf32>
    %85 = vector.broadcast %15 : vector<1x8xf32> to vector<64x8xf32>
    %86 = arith.addf %84, %85 : vector<64x8xf32>
    %87 = arith.addf %75, %86 : vector<64x8xf32>
    %cst_24 = arith.constant dense<0.000000e+00> : vector<64xf32>
    %88 = vector.multi_reduction <add>, %87, %cst_24 [1] : vector<64x8xf32> to vector<64xf32>
    %89 = vector.shape_cast %88 : vector<64xf32> to vector<64x1xf32>
    %cst_25 = arith.constant 8.000000e+00 : f32
    %90 = vector.broadcast %cst_25 : f32 to vector<64x1xf32>
    %91 = arith.divf %89, %90 : vector<64x1xf32>
    %92 = arith.mulf %87, %87 : vector<64x8xf32>
    %cst_26 = arith.constant dense<0.000000e+00> : vector<64xf32>
    %93 = vector.multi_reduction <add>, %92, %cst_26 [1] : vector<64x8xf32> to vector<64xf32>
    %94 = vector.shape_cast %93 : vector<64xf32> to vector<64x1xf32>
    %cst_27 = arith.constant 8.000000e+00 : f32
    %95 = vector.broadcast %cst_27 : f32 to vector<64x1xf32>
    %96 = arith.divf %94, %95 : vector<64x1xf32>
    %97 = arith.mulf %91, %91 : vector<64x1xf32>
    %98 = arith.subf %96, %97 : vector<64x1xf32>
    %99 = vector.broadcast %91 : vector<64x1xf32> to vector<64x8xf32>
    %100 = arith.subf %87, %99 : vector<64x8xf32>
    %cst_28 = arith.constant 9.99999974E-6 : f32
    %101 = vector.broadcast %cst_28 : f32 to vector<64x1xf32>
    %102 = arith.addf %98, %101 : vector<64x1xf32>
    %103 = math.rsqrt %102 : vector<64x1xf32>
    %104 = vector.broadcast %103 : vector<64x1xf32> to vector<64x8xf32>
    %105 = arith.mulf %100, %104 : vector<64x8xf32>
    %106 = vector.broadcast %12 : vector<1x8xf32> to vector<64x8xf32>
    %107 = arith.mulf %105, %106 : vector<64x8xf32>
    %108 = vector.broadcast %13 : vector<1x8xf32> to vector<64x8xf32>
    %109 = arith.addf %107, %108 : vector<64x8xf32>
    %c1_i32 = arith.constant 1 : i32
    %110 = arith.index_cast %c1_i32 : i32 to index
    %c0_29 = arith.constant 0 : index
    %c0_30 = arith.constant 0 : index
    %111 = vector.load %arg1[%110, %c0_29, %c0_30] : memref<2x8x64xbf16, #tpu.memory_space<vmem>>, vector<1x8x64xbf16>
    %112 = vector.shape_cast %111 : vector<1x8x64xbf16> to vector<8x64xbf16>
    %113 = arith.index_cast %c1_i32 : i32 to index
    %c0_31 = arith.constant 0 : index
    %c0_32 = arith.constant 0 : index
    %114 = vector.load %arg2[%113, %c0_31, %c0_32] : memref<2x32x8xbf16, #tpu.memory_space<vmem>>, vector<1x32x8xbf16>
    %115 = vector.shape_cast %114 : vector<1x32x8xbf16> to vector<32x8xbf16>
    %116 = arith.index_cast %c1_i32 : i32 to index
    %c0_33 = arith.constant 0 : index
    %c0_34 = arith.constant 0 : index
    %117 = vector.load %arg3[%116, %c0_33, %c0_34] : memref<2x1x88xf32, #tpu.memory_space<vmem>>, vector<1x1x88xf32>
    %118 = vector.shape_cast %117 : vector<1x1x88xf32> to vector<1x88xf32>
    %119 = vector.extract_strided_slice %118 {offsets = [0, 0], sizes = [1, 24], strides = [1, 1]} : vector<1x88xf32> to vector<1x24xf32>
    %120 = vector.extract_strided_slice %118 {offsets = [0, 24], sizes = [1, 8], strides = [1, 1]} : vector<1x88xf32> to vector<1x8xf32>
    %121 = vector.extract_strided_slice %118 {offsets = [0, 32], sizes = [1, 8], strides = [1, 1]} : vector<1x88xf32> to vector<1x8xf32>
    %122 = vector.extract_strided_slice %118 {offsets = [0, 40], sizes = [1, 8], strides = [1, 1]} : vector<1x88xf32> to vector<1x8xf32>
    %123 = vector.extract_strided_slice %118 {offsets = [0, 48], sizes = [1, 32], strides = [1, 1]} : vector<1x88xf32> to vector<1x32xf32>
    %124 = vector.extract_strided_slice %118 {offsets = [0, 80], sizes = [1, 8], strides = [1, 1]} : vector<1x88xf32> to vector<1x8xf32>
    %125 = arith.truncf %109 : vector<64x8xf32> to vector<64x8xbf16>
    %126 = vector.extract_strided_slice %112 {offsets = [0, 0], sizes = [8, 24], strides = [1, 1]} : vector<8x64xbf16> to vector<8x24xbf16>
    %cst_35 = arith.constant dense<0.000000e+00> : vector<64x24xf32>
    %127 = tpu.matmul %125, %126, %cst_35 {dimension_numbers = #tpu.dot_dimension_numbers<[1], [0], [0], [1], [0, 0, 1, 1], [], []>} : vector<64x8xbf16>, vector<8x24xbf16>, vector<64x24xf32> -> vector<64x24xf32>
    %128 = vector.broadcast %119 : vector<1x24xf32> to vector<64x24xf32>
    %129 = arith.addf %127, %128 : vector<64x24xf32>
    %130 = vector.extract_strided_slice %129 {offsets = [0, 0], sizes = [64, 8], strides = [1, 1]} : vector<64x24xf32> to vector<64x8xf32>
    %131 = vector.extract_strided_slice %129 {offsets = [0, 8], sizes = [64, 8], strides = [1, 1]} : vector<64x24xf32> to vector<64x8xf32>
    %132 = vector.extract_strided_slice %129 {offsets = [0, 16], sizes = [64, 8], strides = [1, 1]} : vector<64x24xf32> to vector<64x8xf32>
    %133 = arith.truncf %130 : vector<64x8xf32> to vector<64x8xbf16>
    %134 = arith.truncf %131 : vector<64x8xf32> to vector<64x8xbf16>
    %cst_36 = arith.constant dense<0.000000e+00> : vector<64x64xf32>
    %135 = tpu.matmul %133, %134, %cst_36 {dimension_numbers = #tpu.dot_dimension_numbers<[1], [1], [0], [0], [0, 0, 1, 0], [], []>} : vector<64x8xbf16>, vector<64x8xbf16>, vector<64x64xf32> -> vector<64x64xf32>
    %cst_37 = arith.constant 0.353553385 : f32
    %136 = vector.broadcast %cst_37 : f32 to vector<64x64xf32>
    %137 = arith.mulf %135, %136 : vector<64x64xf32>
    %c0_38 = arith.constant 0 : index
    %c0_39 = arith.constant 0 : index
    %138 = vector.load %arg4[%c0_38, %c0_39] : memref<68x64xf32, #tpu.memory_space<vmem>>, vector<64x64xf32>
    %139 = arith.addf %137, %138 : vector<64x64xf32>
    %cst_40 = arith.constant dense<0xFF800000> : vector<64xf32>
    %140 = vector.multi_reduction <maximumf>, %139, %cst_40 [1] : vector<64x64xf32> to vector<64xf32>
    %141 = vector.shape_cast %140 : vector<64xf32> to vector<64x1xf32>
    %142 = vector.broadcast %141 : vector<64x1xf32> to vector<64x64xf32>
    %143 = arith.subf %139, %142 : vector<64x64xf32>
    %144 = math.exp %143 : vector<64x64xf32>
    %cst_41 = arith.constant dense<0.000000e+00> : vector<64xf32>
    %145 = vector.multi_reduction <add>, %144, %cst_41 [1] : vector<64x64xf32> to vector<64xf32>
    %146 = vector.shape_cast %145 : vector<64xf32> to vector<64x1xf32>
    %147 = tpu.reciprocal %146 {approx = true} : vector<64x1xf32> -> vector<64x1xf32>
    %148 = arith.mulf %146, %147 : vector<64x1xf32>
    %cst_42 = arith.constant 2.000000e+00 : f32
    %149 = vector.broadcast %cst_42 : f32 to vector<64x1xf32>
    %150 = arith.subf %149, %148 : vector<64x1xf32>
    %151 = arith.mulf %147, %150 : vector<64x1xf32>
    %152 = vector.broadcast %151 : vector<64x1xf32> to vector<64x64xf32>
    %153 = arith.mulf %144, %152 : vector<64x64xf32>
    %154 = arith.truncf %153 : vector<64x64xf32> to vector<64x64xbf16>
    %155 = arith.truncf %132 : vector<64x8xf32> to vector<64x8xbf16>
    %cst_43 = arith.constant dense<0.000000e+00> : vector<64x8xf32>
    %156 = tpu.matmul %154, %155, %cst_43 {dimension_numbers = #tpu.dot_dimension_numbers<[1], [0], [0], [1], [0, 0, 1, 1], [], []>} : vector<64x64xbf16>, vector<64x8xbf16>, vector<64x8xf32> -> vector<64x8xf32>
    %157 = arith.truncf %156 : vector<64x8xf32> to vector<64x8xbf16>
    %158 = vector.extract_strided_slice %112 {offsets = [0, 24], sizes = [8, 8], strides = [1, 1]} : vector<8x64xbf16> to vector<8x8xbf16>
    %cst_44 = arith.constant dense<0.000000e+00> : vector<64x8xf32>
    %159 = tpu.matmul %157, %158, %cst_44 {dimension_numbers = #tpu.dot_dimension_numbers<[1], [0], [0], [1], [0, 0, 1, 1], [], []>} : vector<64x8xbf16>, vector<8x8xbf16>, vector<64x8xf32> -> vector<64x8xf32>
    %160 = vector.broadcast %120 : vector<1x8xf32> to vector<64x8xf32>
    %161 = arith.addf %159, %160 : vector<64x8xf32>
    %162 = arith.addf %109, %161 : vector<64x8xf32>
    %cst_45 = arith.constant dense<0.000000e+00> : vector<64xf32>
    %163 = vector.multi_reduction <add>, %162, %cst_45 [1] : vector<64x8xf32> to vector<64xf32>
    %164 = vector.shape_cast %163 : vector<64xf32> to vector<64x1xf32>
    %cst_46 = arith.constant 8.000000e+00 : f32
    %165 = vector.broadcast %cst_46 : f32 to vector<64x1xf32>
    %166 = arith.divf %164, %165 : vector<64x1xf32>
    %167 = arith.mulf %162, %162 : vector<64x8xf32>
    %cst_47 = arith.constant dense<0.000000e+00> : vector<64xf32>
    %168 = vector.multi_reduction <add>, %167, %cst_47 [1] : vector<64x8xf32> to vector<64xf32>
    %169 = vector.shape_cast %168 : vector<64xf32> to vector<64x1xf32>
    %cst_48 = arith.constant 8.000000e+00 : f32
    %170 = vector.broadcast %cst_48 : f32 to vector<64x1xf32>
    %171 = arith.divf %169, %170 : vector<64x1xf32>
    %172 = arith.mulf %166, %166 : vector<64x1xf32>
    %173 = arith.subf %171, %172 : vector<64x1xf32>
    %174 = vector.broadcast %166 : vector<64x1xf32> to vector<64x8xf32>
    %175 = arith.subf %162, %174 : vector<64x8xf32>
    %cst_49 = arith.constant 9.99999974E-6 : f32
    %176 = vector.broadcast %cst_49 : f32 to vector<64x1xf32>
    %177 = arith.addf %173, %176 : vector<64x1xf32>
    %178 = math.rsqrt %177 : vector<64x1xf32>
    %179 = vector.broadcast %178 : vector<64x1xf32> to vector<64x8xf32>
    %180 = arith.mulf %175, %179 : vector<64x8xf32>
    %181 = vector.broadcast %121 : vector<1x8xf32> to vector<64x8xf32>
    %182 = arith.mulf %180, %181 : vector<64x8xf32>
    %183 = vector.broadcast %122 : vector<1x8xf32> to vector<64x8xf32>
    %184 = arith.addf %182, %183 : vector<64x8xf32>
    %185 = arith.truncf %184 : vector<64x8xf32> to vector<64x8xbf16>
    %186 = vector.extract_strided_slice %112 {offsets = [0, 32], sizes = [8, 32], strides = [1, 1]} : vector<8x64xbf16> to vector<8x32xbf16>
    %cst_50 = arith.constant dense<0.000000e+00> : vector<64x32xf32>
    %187 = tpu.matmul %185, %186, %cst_50 {dimension_numbers = #tpu.dot_dimension_numbers<[1], [0], [0], [1], [0, 0, 1, 1], [], []>} : vector<64x8xbf16>, vector<8x32xbf16>, vector<64x32xf32> -> vector<64x32xf32>
    %188 = vector.broadcast %123 : vector<1x32xf32> to vector<64x32xf32>
    %189 = arith.addf %187, %188 : vector<64x32xf32>
    %cst_51 = arith.constant 0.000000e+00 : f32
    %190 = vector.broadcast %cst_51 : f32 to vector<64x32xf32>
    %191 = arith.maximumf %189, %190 : vector<64x32xf32>
    %192 = arith.truncf %191 : vector<64x32xf32> to vector<64x32xbf16>
    %cst_52 = arith.constant dense<0.000000e+00> : vector<64x8xf32>
    %193 = tpu.matmul %192, %115, %cst_52 {dimension_numbers = #tpu.dot_dimension_numbers<[1], [0], [0], [1], [0, 0, 1, 1], [], []>} : vector<64x32xbf16>, vector<32x8xbf16>, vector<64x8xf32> -> vector<64x8xf32>
    %194 = vector.broadcast %124 : vector<1x8xf32> to vector<64x8xf32>
    %195 = arith.addf %193, %194 : vector<64x8xf32>
    %196 = arith.addf %184, %195 : vector<64x8xf32>
    %cst_53 = arith.constant dense<0.000000e+00> : vector<64xf32>
    %197 = vector.multi_reduction <add>, %196, %cst_53 [1] : vector<64x8xf32> to vector<64xf32>
    %198 = vector.shape_cast %197 : vector<64xf32> to vector<64x1xf32>
    %cst_54 = arith.constant 8.000000e+00 : f32
    %199 = vector.broadcast %cst_54 : f32 to vector<64x1xf32>
    %200 = arith.divf %198, %199 : vector<64x1xf32>
    %201 = arith.mulf %196, %196 : vector<64x8xf32>
    %cst_55 = arith.constant dense<0.000000e+00> : vector<64xf32>
    %202 = vector.multi_reduction <add>, %201, %cst_55 [1] : vector<64x8xf32> to vector<64xf32>
    %203 = vector.shape_cast %202 : vector<64xf32> to vector<64x1xf32>
    %cst_56 = arith.constant 8.000000e+00 : f32
    %204 = vector.broadcast %cst_56 : f32 to vector<64x1xf32>
    %205 = arith.divf %203, %204 : vector<64x1xf32>
    %206 = arith.mulf %200, %200 : vector<64x1xf32>
    %207 = arith.subf %205, %206 : vector<64x1xf32>
    %208 = vector.broadcast %200 : vector<64x1xf32> to vector<64x8xf32>
    %209 = arith.subf %196, %208 : vector<64x8xf32>
    %cst_57 = arith.constant 9.99999974E-6 : f32
    %210 = vector.broadcast %cst_57 : f32 to vector<64x1xf32>
    %211 = arith.addf %207, %210 : vector<64x1xf32>
    %212 = math.rsqrt %211 : vector<64x1xf32>
    %213 = vector.broadcast %212 : vector<64x1xf32> to vector<64x8xf32>
    %214 = arith.mulf %209, %213 : vector<64x8xf32>
    %215 = vector.broadcast %121 : vector<1x8xf32> to vector<64x8xf32>
    %216 = arith.mulf %214, %215 : vector<64x8xf32>
    %217 = vector.broadcast %122 : vector<1x8xf32> to vector<64x8xf32>
    %218 = arith.addf %216, %217 : vector<64x8xf32>
    %c2_i32 = arith.constant 2 : i32
    %c64 = arith.constant 64 : index
    %c0_58 = arith.constant 0 : index
    %219 = vector.load %arg4[%c64, %c0_58] : memref<68x64xf32, #tpu.memory_space<vmem>>, vector<4x64xf32>
    %cst_59 = arith.constant dense<0.000000e+00> : vector<4x8xf32>
    %220 = tpu.matmul %219, %218, %cst_59 {dimension_numbers = #tpu.dot_dimension_numbers<[1], [0], [0], [1], [0, 0, 1, 1], [], []>} : vector<4x64xf32>, vector<64x8xf32>, vector<4x8xf32> -> vector<4x8xf32>
    %c0_60 = arith.constant 0 : index
    %c0_61 = arith.constant 0 : index
    %221 = vector.load %arg5[%c0_60, %c0_61] : memref<9x5xf32, #tpu.memory_space<vmem>>, vector<8x5xf32>
    %cst_62 = arith.constant dense<0.000000e+00> : vector<4x5xf32>
    %222 = tpu.matmul %220, %221, %cst_62 {dimension_numbers = #tpu.dot_dimension_numbers<[1], [0], [0], [1], [0, 0, 1, 1], [], []>} : vector<4x8xf32>, vector<8x5xf32>, vector<4x5xf32> -> vector<4x5xf32>
    %c8 = arith.constant 8 : index
    %c0_63 = arith.constant 0 : index
    %223 = vector.load %arg5[%c8, %c0_63] : memref<9x5xf32, #tpu.memory_space<vmem>>, vector<1x5xf32>
    %224 = vector.broadcast %223 : vector<1x5xf32> to vector<4x5xf32>
    %225 = arith.addf %222, %224 : vector<4x5xf32>
    %c0_64 = arith.constant 0 : index
    %c0_65 = arith.constant 0 : index
    %226 = vector.load %arg6[%c0_64, %c0_65] : memref<4x5xf32, #tpu.memory_space<vmem>>, vector<4x5xf32>
    tpu.vector_store %arg6[%c0_64, %c0_65], %225 {strides = array<i32>} : memref<4x5xf32, #tpu.memory_space<vmem>>, vector<4x5xf32>,
    return
  }
}

</mosaic_0001>

<llo_original>
// kernel: transformer_network_forward.1
$region0: #{transformer_network_forward.1}
  #allocation0 [shape = 'u32[]', space=smem, size = 0x4, offset = 0x4, fixed_abs, tag = 'smem constant byte address 0x4 - core index']
  #allocation1 [shape = 'u32[144,128]{1,0:T(1,128)}', space=vmem, size = 0x12000, scoped, tag = 'internal scratch']
  %s0 = inlined_call_operand.vmem [shape: f32[64,8], index: 0, kind: input, shape index: {}]
  %s1 = inlined_call_operand.vmem [shape: bf16[2,8,64], index: 1, kind: input, shape index: {}]
  %s2 = inlined_call_operand.vmem [shape: bf16[2,32,8], index: 2, kind: input, shape index: {}]
  %s3 = inlined_call_operand.vmem [shape: f32[2,1,88], index: 3, kind: input, shape index: {}]
  %s4 = inlined_call_operand.vmem [shape: f32[68,64], index: 4, kind: input, shape index: {}]
  %s5 = inlined_call_operand.vmem [shape: f32[9,5], index: 5, kind: input, shape index: {}]
  %s6 = inlined_call_operand.hbm [shape: f32[4,5], index: 6, kind: output, shape index: {}]
  %s7 = sld [smem:[#allocation0]]
  $region34: #{transformer_network_forward.1} parent=0
    _
  %s9 = ssub.s32 1, %s7
  %s10 = scalar_select 0, %s9, %s7
  $region1: #{transformer_network_forward.1} parent=0
    #allocation2 [shape = 'u8[2048]{0}', space=vmem, size = 0x800, scoped, tag = 'output window, operand 0, single buffered']
    #allocation3 [shape = 's32[1]{0}', space=sflag, size = 0x4, scoped, tag = 'scoped memory for transformer_network_forward.1']
    %11 = vsyncpa [#allocation3], 0
    // Predicated region
    $region2: #{transformer_network_forward.1} parent=1 // pred_check
      _
    $region3: #{transformer_network_forward.1} parent=1 // pred_check_branch
      %13 = sbr.rel (0) target = $region5
    $region4: #{transformer_network_forward.1} parent=1 // pred_region
      _
    $region5: #{transformer_network_forward.1} parent=1 // pred_fallthru
      _
    // Predicated region
    $region6: #{transformer_network_forward.1} parent=1 // pred_check
      _
    $region7: #{transformer_network_forward.1} parent=1 // pred_check_branch
      %15 = sbr.rel (0) target = $region9
    $region8: #{transformer_network_forward.1} parent=1 // pred_region
      _
    $region9: #{transformer_network_forward.1} parent=1 // pred_fallthru
      _
    // Predicated region
    $region10: #{transformer_network_forward.1} parent=1 // pred_check
      _
    $region11: #{transformer_network_forward.1} parent=1 // pred_check_branch
      %17 = sbr.rel (0) target = $region13
    $region12: #{transformer_network_forward.1} parent=1 // pred_region
      _
    $region13: #{transformer_network_forward.1} parent=1 // pred_fallthru
      _
    // Predicated region
    $region14: #{transformer_network_forward.1} parent=1 // pred_check
      _
    $region15: #{transformer_network_forward.1} parent=1 // pred_check_branch
      %19 = sbr.rel (0) target = $region17
    $region16: #{transformer_network_forward.1} parent=1 // pred_region
      _
    $region17: #{transformer_network_forward.1} parent=1 // pred_fallthru
      _
    // Predicated region
    $region18: #{transformer_network_forward.1} parent=1 // pred_check
      _
    $region19: #{transformer_network_forward.1} parent=1 // pred_check_branch
      %21 = sbr.rel (0) target = $region21
    $region20: #{transformer_network_forward.1} parent=1 // pred_region
      _
    $region21: #{transformer_network_forward.1} parent=1 // pred_fallthru
      _
    // Predicated region
    $region22: #{transformer_network_forward.1} parent=1 // pred_check
      _
    $region23: #{transformer_network_forward.1} parent=1 // pred_check_branch
      %23 = sbr.rel (0) target = $region25
    $region24: #{transformer_network_forward.1} parent=1 // pred_region
      _
    $region25: #{transformer_network_forward.1} parent=1 // pred_fallthru
      _
    %v25 = vld [vmem:[%s0] sm:$0xff]
    %v26 = vld [vmem:[%s0 + $0x8] sm:$0xff]
    %v27 = vld [vmem:[%s0 + $0x10] sm:$0xff]
    %v28 = vld [vmem:[%s0 + $0x18] sm:$0xff]
    %v29 = vld [vmem:[%s0 + $0x20] sm:$0xff]
    %v30 = vld [vmem:[%s0 + $0x28] sm:$0xff]
    %v31 = vld [vmem:[%s0 + $0x30] sm:$0xff]
    %v32 = vld [vmem:[%s0 + $0x38] sm:$0xff]
    %v33 = vld [vmem:[%s1] sm:$0xf]
    %v34 = vld [vmem:[%s2] sm:$0xf]
    %v35 = vld [vmem:[%s2 + $0x4] sm:$0xf]
    %v36 = vld [vmem:[%s2 + $0x8] sm:$0xf]
    %v37 = vld [vmem:[%s2 + $0xc] sm:$0xf]
    %v38 = vld [vmem:[%s3] sm:$0x1]
    %v39 = vpack.c.bf16 %v26, %v25
    %v40 = vpack.c.bf16 %v28, %v27
    %v41 = vpack.c.bf16 %v30, %v29
    %v42 = vpack.c.bf16 %v32, %v31
    %v44 = vlaneseq
    %v45 = vshrl.u32 %v44, 7
    %v46 = vsub.s32 0, %v45
    %v47 = vrot.slane %v38, %v46
    %vm49 = vcmask 64512
    %v51 = vsel %vm49, %v39, 0
    %v54 = vsel %vm49, %v40, 0
    %v57 = vsel %vm49, %v41, 0
    %v60 = vsel %vm49, %v42, 0
    %vm62 = vcmask 1043456
    %v64 = vsel %vm62, %v33, 0
    %66 = vmatprep.subr.bf16.mxu0 0
    %67 = vmatpush1.bf16.msra.mxu0 %v64
    %68 = vmatprep.subr.bf16.mxu0 0
    %69 = vmatpush1.bf16.msra.mxu0 0
    %70 = vmatprep.subr.bf16.mxu0 0
    %71 = vmatpush1.bf16.msra.mxu0 0
    %72 = vmatprep.subr.bf16.mxu0 0
    %73 = vmatpush1.bf16.msra.mxu0 0
    %74 = vmatprep.subr.bf16.mxu0 0
    %75 = vmatpush1.bf16.msra.mxu0 0
    %76 = vmatprep.subr.bf16.mxu0 0
    %77 = vmatpush1.bf16.msra.mxu0 0
    %78 = vmatprep.subr.bf16.mxu0 0
    %79 = vmatpush1.bf16.msra.mxu0 0
    %80 = vmatprep.subr.bf16.mxu0 0
    %81 = vmatpush1.bf16.msra.mxu0 0
    %82 = vmatprep.subr.bf16.mxu0 0
    %83 = vmatpush1.bf16.msra.mxu0 0
    %84 = vmatprep.subr.bf16.mxu0 0
    %85 = vmatpush1.bf16.msra.mxu0 0
    %86 = vmatprep.subr.bf16.mxu0 0
    %87 = vmatpush1.bf16.msra.mxu0 0
    %88 = vmatprep.subr.bf16.mxu0 0
    %89 = vmatpush1.bf16.msra.mxu0 0
    %90 = vmatprep.subr.bf16.mxu0 0
    %91 = vmatpush1.bf16.msra.mxu0 0
    %92 = vmatprep.subr.bf16.mxu0 0
    %93 = vmatpush1.bf16.msra.mxu0 0
    %94 = vmatprep.subr.bf16.mxu0 0
    %95 = vmatpush1.bf16.msra.mxu0 0
    %96 = vmatprep.subr.bf16.mxu0 0
    %97 = vmatpush1.bf16.msra.mxu0 0
    %98 = vmatprep.mubr.bf16.mxu0 0
    %99 = vmatmul.mubr.bf16.gmra.mrb[0].mxu0 %v51
    %v100 = vpop.f32.mrb[0].mxu0
    %v101 = vadd.f32 %v47, %v100
    %v102 = vpop.f32.mrb[0].mxu0
    %v103 = vpop.f32.mrb[0].mxu0
    %v104 = vadd.f32 %v47, %v103
    %v105 = vpop.f32.mrb[0].mxu0
    %106 = vmatprep.mubr.bf16.mxu0 0
    %107 = vmatmul.mubr.bf16.gmra.mrb[0].mxu0 %v54
    %v108 = vpop.f32.mrb[0].mxu0
    %v109 = vadd.f32 %v47, %v108
    %v110 = vpop.f32.mrb[0].mxu0
    %v111 = vpop.f32.mrb[0].mxu0
    %v112 = vadd.f32 %v47, %v111
    %v113 = vpop.f32.mrb[0].mxu0
    %114 = vmatprep.mubr.bf16.mxu0 0
    %115 = vmatmul.mubr.bf16.gmra.mrb[0].mxu0 %v57
    %v116 = vpop.f32.mrb[0].mxu0
    %v117 = vadd.f32 %v47, %v116
    %v118 = vpop.f32.mrb[0].mxu0
    %v119 = vpop.f32.mrb[0].mxu0
    %v120 = vadd.f32 %v47, %v119
    %v121 = vpop.f32.mrb[0].mxu0
    %122 = vmatprep.mubr.bf16.mxu0 0
    %123 = vmatmul.mubr.bf16.gmra.mrb[0].mxu0 %v60
    %v124 = vpop.f32.mrb[0].mxu0
    %v125 = vadd.f32 %v47, %v124
    %v126 = vpop.f32.mrb[0].mxu0
    %v127 = vpop.f32.mrb[0].mxu0
    %v128 = vadd.f32 %v47, %v127
    %v129 = vpop.f32.mrb[0].mxu0
    %130 = vdwg.mxu0
    %v131 = vpack.c.bf16 %v104, %v101
    %v132 = vpack.c.bf16 %v112, %v109
    %v133 = vpack.c.bf16 %v120, %v117
    %v134 = vpack.c.bf16 %v128, %v125
    %139 = vrot.lane.b32.xlu0 %v131, 120
    %v140 = vpop.permute.xlu0 %139
    %141 = vrot.lane.b32.xlu0 %v132, 120
    %v142 = vpop.permute.xlu0 %141
    %143 = vrot.lane.b32.xlu0 %v133, 120
    %v144 = vpop.permute.xlu0 %143
    %145 = vrot.lane.b32.xlu0 %v134, 120
    %v146 = vpop.permute.xlu0 %145
    %v148 = vsel %vm49, %v131, 0
    %v151 = vsel %vm49, %v132, 0
    %v154 = vsel %vm49, %v133, 0
    %v157 = vsel %vm49, %v134, 0
    %v160 = vsel %vm49, %v140, 0
    %v163 = vsel %vm49, %v142, 0
    %v166 = vsel %vm49, %v144, 0
    %v169 = vsel %vm49, %v146, 0
    %171 = vmatprep.subr.bf16.mxu0 0
    %172 = vmatpush1.bf16.xpose.msra.mxu0 %v160
    %173 = vmatprep.subr.bf16.mxu0 0
    %174 = vmatpush1.bf16.xpose.msra.mxu0 %v163
    %175 = vmatprep.subr.bf16.mxu0 0
    %176 = vmatpush1.bf16.xpose.msra.mxu0 %v166
    %177 = vmatprep.subr.bf16.mxu0 0
    %178 = vmatpush1.bf16.xpose.msra.mxu0 %v169
    %179 = vmatprep.subr.bf16.mxu0 0
    %180 = vmatpush1.bf16.xpose.msra.mxu0 0
    %181 = vmatprep.subr.bf16.mxu0 0
    %182 = vmatpush1.bf16.xpose.msra.mxu0 0
    %183 = vmatprep.subr.bf16.mxu0 0
    %184 = vmatpush1.bf16.xpose.msra.mxu0 0
    %185 = vmatprep.subr.bf16.mxu0 0
    %186 = vmatpush1.bf16.xpose.msra.mxu0 0
    %187 = vmatprep.subr.bf16.mxu0 0
    %188 = vmatpush1.bf16.xpose.msra.mxu0 0
    %189 = vmatprep.subr.bf16.mxu0 0
    %190 = vmatpush1.bf16.xpose.msra.mxu0 0
    %191 = vmatprep.subr.bf16.mxu0 0
    %192 = vmatpush1.bf16.xpose.msra.mxu0 0
    %193 = vmatprep.subr.bf16.mxu0 0
    %194 = vmatpush1.bf16.xpose.msra.mxu0 0
    %195 = vmatprep.subr.bf16.mxu0 0
    %196 = vmatpush1.bf16.xpose.msra.mxu0 0
    %197 = vmatprep.subr.bf16.mxu0 0
    %198 = vmatpush1.bf16.xpose.msra.mxu0 0
    %199 = vmatprep.subr.bf16.mxu0 0
    %200 = vmatpush1.bf16.xpose.msra.mxu0 0
    %201 = vmatprep.subr.bf16.mxu0 0
    %202 = vmatpush1.bf16.xpose.msra.mxu0 0
    %203 = vmatprep.mubr.bf16.mxu0 0
    %204 = vmatmul.mubr.bf16.gmra.mrb[0].mxu0 %v148
    %v205 = vpop.f32.mrb[0].mxu0
    %v206 = vadd.f32 0.0, %v205
    %v207 = vpop.f32.mrb[0].mxu0
    %v208 = vpop.f32.mrb[0].mxu0
    %v209 = vadd.f32 0.0, %v208
    %v210 = vpop.f32.mrb[0].mxu0
    %211 = vmatprep.mubr.bf16.mxu0 0
    %212 = vmatmul.mubr.bf16.gmra.mrb[0].mxu0 %v151
    %v213 = vpop.f32.mrb[0].mxu0
    %v214 = vadd.f32 0.0, %v213
    %v215 = vpop.f32.mrb[0].mxu0
    %v216 = vpop.f32.mrb[0].mxu0
    %v217 = vadd.f32 0.0, %v216
    %v218 = vpop.f32.mrb[0].mxu0
    %219 = vmatprep.mubr.bf16.mxu0 0
    %220 = vmatmul.mubr.bf16.gmra.mrb[0].mxu0 %v154
    %v221 = vpop.f32.mrb[0].mxu0
    %v222 = vadd.f32 0.0, %v221
    %v223 = vpop.f32.mrb[0].mxu0
    %v224 = vpop.f32.mrb[0].mxu0
    %v225 = vadd.f32 0.0, %v224
    %v226 = vpop.f32.mrb[0].mxu0
    %227 = vmatprep.mubr.bf16.mxu0 0
    %228 = vmatmul.mubr.bf16.gmra.mrb[0].mxu0 %v157
    %v229 = vpop.f32.mrb[0].mxu0
    %v230 = vadd.f32 0.0, %v229
    %v231 = vpop.f32.mrb[0].mxu0
    %v232 = vpop.f32.mrb[0].mxu0
    %v233 = vadd.f32 0.0, %v232
    %v234 = vpop.f32.mrb[0].mxu0
    %235 = vdwg.mxu0
    %v236 = vmul.f32 %v206, 0.35355338
    %v237 = vmul.f32 %v209, 0.35355338
    %v238 = vmul.f32 %v214, 0.35355338
    %v239 = vmul.f32 %v217, 0.35355338
    %v240 = vmul.f32 %v222, 0.35355338
    %v241 = vmul.f32 %v225, 0.35355338
    %v242 = vmul.f32 %v230, 0.35355338
    %v243 = vmul.f32 %v233, 0.35355338
    %v244 = vld [vmem:[%s4] sm:$0xff]
    %v245 = vld [vmem:[%s4 + $0x8] sm:$0xff]
    %v246 = vld [vmem:[%s4 + $0x10] sm:$0xff]
    %v247 = vld [vmem:[%s4 + $0x18] sm:$0xff]
    %v248 = vld [vmem:[%s4 + $0x20] sm:$0xff]
    %v249 = vld [vmem:[%s4 + $0x28] sm:$0xff]
    %v250 = vld [vmem:[%s4 + $0x30] sm:$0xff]
    %v251 = vld [vmem:[%s4 + $0x38] sm:$0xff]
    %v252 = vadd.f32 %v236, %v244
    %v253 = vadd.f32 %v237, %v245
    %v254 = vadd.f32 %v238, %v246
    %v255 = vadd.f32 %v239, %v247
    %v256 = vadd.f32 %v240, %v248
    %v257 = vadd.f32 %v241, %v249
    %v258 = vadd.f32 %v242, %v250
    %v259 = vadd.f32 %v243, %v251
    %vm260 = vcmask 523264
    %v261 = vsel %vm260, %v252, -inf
    %262 = vmax.xlane.f32.xlu0 %v261
    %v263 = vpop.xlane.xlu0 %262
    %v264 = vsel %vm260, %v253, -inf
    %265 = vmax.xlane.f32.xlu0 %v264
    %v266 = vpop.xlane.xlu0 %265
    %v267 = vsel %vm260, %v254, -inf
    %268 = vmax.xlane.f32.xlu0 %v267
    %v269 = vpop.xlane.xlu0 %268
    %v270 = vsel %vm260, %v255, -inf
    %271 = vmax.xlane.f32.xlu0 %v270
    %v272 = vpop.xlane.xlu0 %271
    %v273 = vsel %vm260, %v256, -inf
    %274 = vmax.xlane.f32.xlu0 %v273
    %v275 = vpop.xlane.xlu0 %274
    %v276 = vsel %vm260, %v257, -inf
    %277 = vmax.xlane.f32.xlu0 %v276
    %v278 = vpop.xlane.xlu0 %277
    %v279 = vsel %vm260, %v258, -inf
    %280 = vmax.xlane.f32.xlu0 %v279
    %v281 = vpop.xlane.xlu0 %280
    %v282 = vsel %vm260, %v259, -inf
    %283 = vmax.xlane.f32.xlu0 %v282
    %v284 = vpop.xlane.xlu0 %283
    %v285 = vsub.f32 %v252, %v263
    %v286 = vsub.f32 %v253, %v266
    %v287 = vsub.f32 %v254, %v269
    %v288 = vsub.f32 %v255, %v272
    %v289 = vsub.f32 %v256, %v275
    %v290 = vsub.f32 %v257, %v278
    %v291 = vsub.f32 %v258, %v281
    %v292 = vsub.f32 %v259, %v284
    %v293 = vmul.f32 %v285, 1.442695
    %v294 = vpow.pop %v293
    %v295 = vmul.f32 %v286, 1.442695
    %v296 = vpow.pop %v295
    %v297 = vmul.f32 %v287, 1.442695
    %v298 = vpow.pop %v297
    %v299 = vmul.f32 %v288, 1.442695
    %v300 = vpow.pop %v299
    %v301 = vmul.f32 %v289, 1.442695
    %v302 = vpow.pop %v301
    %v303 = vmul.f32 %v290, 1.442695
    %v304 = vpow.pop %v303
    %v305 = vmul.f32 %v291, 1.442695
    %v306 = vpow.pop %v305
    %v307 = vmul.f32 %v292, 1.442695
    %v308 = vpow.pop %v307
    %v309 = vsel %vm260, %v294, 0.0
    %310 = vadd.xlane.f32.xlu0 %v309
    %v311 = vpop.xlane.xlu0 %310
    %v312 = vsel %vm260, %v296, 0.0
    %313 = vadd.xlane.f32.xlu0 %v312
    %v314 = vpop.xlane.xlu0 %313
    %v315 = vsel %vm260, %v298, 0.0
    %316 = vadd.xlane.f32.xlu0 %v315
    %v317 = vpop.xlane.xlu0 %316
    %v318 = vsel %vm260, %v300, 0.0
    %319 = vadd.xlane.f32.xlu0 %v318
    %v320 = vpop.xlane.xlu0 %319
    %v321 = vsel %vm260, %v302, 0.0
    %322 = vadd.xlane.f32.xlu0 %v321
    %v323 = vpop.xlane.xlu0 %322
    %v324 = vsel %vm260, %v304, 0.0
    %325 = vadd.xlane.f32.xlu0 %v324
    %v326 = vpop.xlane.xlu0 %325
    %v327 = vsel %vm260, %v306, 0.0
    %328 = vadd.xlane.f32.xlu0 %v327
    %v329 = vpop.xlane.xlu0 %328
    %v330 = vsel %vm260, %v308, 0.0
    %331 = vadd.xlane.f32.xlu0 %v330
    %v332 = vpop.xlane.xlu0 %331
    %v333 = vrcp.pop %v311
    %v334 = vrcp.pop %v314
    %v335 = vrcp.pop %v317
    %v336 = vrcp.pop %v320
    %v337 = vrcp.pop %v323
    %v338 = vrcp.pop %v326
    %v339 = vrcp.pop %v329
    %v340 = vrcp.pop %v332
    %v341 = vmul.f32 %v311, %v333
    %v342 = vmul.f32 %v314, %v334
    %v343 = vmul.f32 %v317, %v335
    %v344 = vmul.f32 %v320, %v336
    %v345 = vmul.f32 %v323, %v337
    %v346 = vmul.f32 %v326, %v338
    %v347 = vmul.f32 %v329, %v339
    %v348 = vmul.f32 %v332, %v340
    %v349 = vsub.f32 2.0, %v341
    %v350 = vsub.f32 2.0, %v342
    %v351 = vsub.f32 2.0, %v343
    %v352 = vsub.f32 2.0, %v344
    %v353 = vsub.f32 2.0, %v345
    %v354 = vsub.f32 2.0, %v346
    %v355 = vsub.f32 2.0, %v347
    %v356 = vsub.f32 2.0, %v348
    %v357 = vmul.f32 %v333, %v349
    %v358 = vmul.f32 %v334, %v350
    %v359 = vmul.f32 %v335, %v351
    %v360 = vmul.f32 %v336, %v352
    %v361 = vmul.f32 %v337, %v353
    %v362 = vmul.f32 %v338, %v354
    %v363 = vmul.f32 %v339, %v355
    %v364 = vmul.f32 %v340, %v356
    %v365 = vmul.f32 %v294, %v357
    %v366 = vmul.f32 %v296, %v358
    %v367 = vmul.f32 %v298, %v359
    %v368 = vmul.f32 %v300, %v360
    %v369 = vmul.f32 %v302, %v361
    %v370 = vmul.f32 %v304, %v362
    %v371 = vmul.f32 %v306, %v363
    %v372 = vmul.f32 %v308, %v364
    %v373 = vpack.c.bf16 %v366, %v365
    %v374 = vpack.c.bf16 %v368, %v367
    %v375 = vpack.c.bf16 %v370, %v369
    %v376 = vpack.c.bf16 %v372, %v371
    %377 = vrot.lane.b32.xlu0 %v131, 112
    %v378 = vpop.permute.xlu0 %377
    %379 = vrot.lane.b32.xlu0 %v132, 112
    %v380 = vpop.permute.xlu0 %379
    %381 = vrot.lane.b32.xlu0 %v133, 112
    %v382 = vpop.permute.xlu0 %381
    %383 = vrot.lane.b32.xlu0 %v134, 112
    %v384 = vpop.permute.xlu0 %383
    %v390 = vsel %vm260, %v373, 0
    %v393 = vsel %vm260, %v374, 0
    %v396 = vsel %vm260, %v375, 0
    %v399 = vsel %vm260, %v376, 0
    %401 = vmatprep.subr.bf16.mxu0 0
    %402 = vmatpush1.bf16.msra.mxu0 %v378
    %403 = vmatprep.subr.bf16.mxu0 0
    %404 = vmatpush1.bf16.msra.mxu0 %v380
    %405 = vmatprep.subr.bf16.mxu0 0
    %406 = vmatpush1.bf16.msra.mxu0 %v382
    %407 = vmatprep.subr.bf16.mxu0 0
    %408 = vmatpush1.bf16.msra.mxu0 %v384
    %409 = vmatprep.subr.bf16.mxu0 0
    %410 = vmatpush1.bf16.msra.mxu0 0
    %411 = vmatprep.subr.bf16.mxu0 0
    %412 = vmatpush1.bf16.msra.mxu0 0
    %413 = vmatprep.subr.bf16.mxu0 0
    %414 = vmatpush1.bf16.msra.mxu0 0
    %415 = vmatprep.subr.bf16.mxu0 0
    %416 = vmatpush1.bf16.msra.mxu0 0
    %417 = vmatprep.subr.bf16.mxu0 0
    %418 = vmatpush1.bf16.msra.mxu0 0
    %419 = vmatprep.subr.bf16.mxu0 0
    %420 = vmatpush1.bf16.msra.mxu0 0
    %421 = vmatprep.subr.bf16.mxu0 0
    %422 = vmatpush1.bf16.msra.mxu0 0
    %423 = vmatprep.subr.bf16.mxu0 0
    %424 = vmatpush1.bf16.msra.mxu0 0
    %425 = vmatprep.subr.bf16.mxu0 0
    %426 = vmatpush1.bf16.msra.mxu0 0
    %427 = vmatprep.subr.bf16.mxu0 0
    %428 = vmatpush1.bf16.msra.mxu0 0
    %429 = vmatprep.subr.bf16.mxu0 0
    %430 = vmatpush1.bf16.msra.mxu0 0
    %431 = vmatprep.subr.bf16.mxu0 0
    %432 = vmatpush1.bf16.msra.mxu0 0
    %433 = vmatprep.mubr.bf16.mxu0 0
    %434 = vmatmul.mubr.bf16.gmra.mrb[0].mxu0 %v390
    %v435 = vpop.f32.mrb[0].mxu0
    %v436 = vadd.f32 0.0, %v435
    %v437 = vpop.f32.mrb[0].mxu0
    %v438 = vpop.f32.mrb[0].mxu0
    %v439 = vadd.f32 0.0, %v438
    %v440 = vpop.f32.mrb[0].mxu0
    %441 = vmatprep.mubr.bf16.mxu0 0
    %442 = vmatmul.mubr.bf16.gmra.mrb[0].mxu0 %v393
    %v443 = vpop.f32.mrb[0].mxu0
    %v444 = vadd.f32 0.0, %v443
    %v445 = vpop.f32.mrb[0].mxu0
    %v446 = vpop.f32.mrb[0].mxu0
    %v447 = vadd.f32 0.0, %v446
    %v448 = vpop.f32.mrb[0].mxu0
    %449 = vmatprep.mubr.bf16.mxu0 0
    %450 = vmatmul.mubr.bf16.gmra.mrb[0].mxu0 %v396
    %v451 = vpop.f32.mrb[0].mxu0
    %v452 = vadd.f32 0.0, %v451
    %v453 = vpop.f32.mrb[0].mxu0
    %v454 = vpop.f32.mrb[0].mxu0
    %v455 = vadd.f32 0.0, %v454
    %v456 = vpop.f32.mrb[0].mxu0
    %457 = vmatprep.mubr.bf16.mxu0 0
    %458 = vmatmul.mubr.bf16.gmra.mrb[0].mxu0 %v399
    %v459 = vpop.f32.mrb[0].mxu0
    %v460 = vadd.f32 0.0, %v459
    %v461 = vpop.f32.mrb[0].mxu0
    %v462 = vpop.f32.mrb[0].mxu0
    %v463 = vadd.f32 0.0, %v462
    %v464 = vpop.f32.mrb[0].mxu0
    %465 = vdwg.mxu0
    %v466 = vpack.c.bf16 %v439, %v436
    %v467 = vpack.c.bf16 %v447, %v444
    %v468 = vpack.c.bf16 %v455, %v452
    %v469 = vpack.c.bf16 %v463, %v460
    %v471 = vunpack.c.l.b16 %v33
    %v472 = vpack.c.b16 %v471, %v471
    %473 = vrot.lane.b32.xlu0 %v472, 104
    %v474 = vpop.permute.xlu0 %473
    %475 = vrot.lane.b32.xlu0 %v47, 104
    %v476 = vpop.permute.xlu0 %475
    %v479 = vsel %vm49, %v466, 0
    %v482 = vsel %vm49, %v467, 0
    %v485 = vsel %vm49, %v468, 0
    %v488 = vsel %vm49, %v469, 0
    %v491 = vsel %vm62, %v474, 0
    %493 = vmatprep.subr.bf16.mxu0 0
    %494 = vmatpush1.bf16.msra.mxu0 %v491
    %495 = vmatprep.subr.bf16.mxu0 0
    %496 = vmatpush1.bf16.msra.mxu0 0
    %497 = vmatprep.subr.bf16.mxu0 0
    %498 = vmatpush1.bf16.msra.mxu0 0
    %499 = vmatprep.subr.bf16.mxu0 0
    %500 = vmatpush1.bf16.msra.mxu0 0
    %501 = vmatprep.subr.bf16.mxu0 0
    %502 = vmatpush1.bf16.msra.mxu0 0
    %503 = vmatprep.subr.bf16.mxu0 0
    %504 = vmatpush1.bf16.msra.mxu0 0
    %505 = vmatprep.subr.bf16.mxu0 0
    %506 = vmatpush1.bf16.msra.mxu0 0
    %507 = vmatprep.subr.bf16.mxu0 0
    %508 = vmatpush1.bf16.msra.mxu0 0
    %509 = vmatprep.subr.bf16.mxu0 0
    %510 = vmatpush1.bf16.msra.mxu0 0
    %511 = vmatprep.subr.bf16.mxu0 0
    %512 = vmatpush1.bf16.msra.mxu0 0
    %513 = vmatprep.subr.bf16.mxu0 0
    %514 = vmatpush1.bf16.msra.mxu0 0
    %515 = vmatprep.subr.bf16.mxu0 0
    %516 = vmatpush1.bf16.msra.mxu0 0
    %517 = vmatprep.subr.bf16.mxu0 0
    %518 = vmatpush1.bf16.msra.mxu0 0
    %519 = vmatprep.subr.bf16.mxu0 0
    %520 = vmatpush1.bf16.msra.mxu0 0
    %521 = vmatprep.subr.bf16.mxu0 0
    %522 = vmatpush1.bf16.msra.mxu0 0
    %523 = vmatprep.subr.bf16.mxu0 0
    %524 = vmatpush1.bf16.msra.mxu0 0
    %525 = vmatprep.mubr.bf16.mxu0 0
    %526 = vmatmul.mubr.bf16.gmra.mrb[0].mxu0 %v479
    %v527 = vpop.f32.mrb[0].mxu0
    %v528 = vadd.f32 %v476, %v527
    %v529 = vpop.f32.mrb[0].mxu0
    %v530 = vpop.f32.mrb[0].mxu0
    %v531 = vadd.f32 %v476, %v530
    %v532 = vpop.f32.mrb[0].mxu0
    %533 = vmatprep.mubr.bf16.mxu0 0
    %534 = vmatmul.mubr.bf16.gmra.mrb[0].mxu0 %v482
    %v535 = vpop.f32.mrb[0].mxu0
    %v536 = vadd.f32 %v476, %v535
    %v537 = vpop.f32.mrb[0].mxu0
    %v538 = vpop.f32.mrb[0].mxu0
    %v539 = vadd.f32 %v476, %v538
    %v540 = vpop.f32.mrb[0].mxu0
    %541 = vmatprep.mubr.bf16.mxu0 0
    %542 = vmatmul.mubr.bf16.gmra.mrb[0].mxu0 %v485
    %v543 = vpop.f32.mrb[0].mxu0
    %v544 = vadd.f32 %v476, %v543
    %v545 = vpop.f32.mrb[0].mxu0
    %v546 = vpop.f32.mrb[0].mxu0
    %v547 = vadd.f32 %v476, %v546
    %v548 = vpop.f32.mrb[0].mxu0
    %549 = vmatprep.mubr.bf16.mxu0 0
    %550 = vmatmul.mubr.bf16.gmra.mrb[0].mxu0 %v488
    %v551 = vpop.f32.mrb[0].mxu0
    %v552 = vadd.f32 %v476, %v551
    %v553 = vpop.f32.mrb[0].mxu0
    %v554 = vpop.f32.mrb[0].mxu0
    %v555 = vadd.f32 %v476, %v554
    %v556 = vpop.f32.mrb[0].mxu0
    %557 = vdwg.mxu0
    %v558 = vadd.f32 %v25, %v528
    %v559 = vadd.f32 %v26, %v531
    %v560 = vadd.f32 %v27, %v536
    %v561 = vadd.f32 %v28, %v539
    %v562 = vadd.f32 %v29, %v544
    %v563 = vadd.f32 %v30, %v547
    %v564 = vadd.f32 %v31, %v552
    %v565 = vadd.f32 %v32, %v555
    %v566 = vsel %vm49, %v558, 0.0
    %567 = vadd.xlane.f32.xlu0 %v566
    %v568 = vpop.xlane.xlu0 %567
    %v569 = vsel %vm49, %v559, 0.0
    %570 = vadd.xlane.f32.xlu0 %v569
    %v571 = vpop.xlane.xlu0 %570
    %v572 = vsel %vm49, %v560, 0.0
    %573 = vadd.xlane.f32.xlu0 %v572
    %v574 = vpop.xlane.xlu0 %573
    %v575 = vsel %vm49, %v561, 0.0
    %576 = vadd.xlane.f32.xlu0 %v575
    %v577 = vpop.xlane.xlu0 %576
    %v578 = vsel %vm49, %v562, 0.0
    %579 = vadd.xlane.f32.xlu0 %v578
    %v580 = vpop.xlane.xlu0 %579
    %v581 = vsel %vm49, %v563, 0.0
    %582 = vadd.xlane.f32.xlu0 %v581
    %v583 = vpop.xlane.xlu0 %582
    %v584 = vsel %vm49, %v564, 0.0
    %585 = vadd.xlane.f32.xlu0 %v584
    %v586 = vpop.xlane.xlu0 %585
    %v587 = vsel %vm49, %v565, 0.0
    %588 = vadd.xlane.f32.xlu0 %v587
    %v589 = vpop.xlane.xlu0 %588
    %v590 = vrcp.pop 8.0
    %v591 = vmul.f32 %v568, %v590
    %v592 = vmul.f32 %v571, %v590
    %v593 = vmul.f32 %v574, %v590
    %v594 = vmul.f32 %v577, %v590
    %v595 = vmul.f32 %v580, %v590
    %v596 = vmul.f32 %v583, %v590
    %v597 = vmul.f32 %v586, %v590
    %v598 = vmul.f32 %v589, %v590
    %v599 = vmul.f32 %v558, %v558
    %v600 = vmul.f32 %v559, %v559
    %v601 = vmul.f32 %v560, %v560
    %v602 = vmul.f32 %v561, %v561
    %v603 = vmul.f32 %v562, %v562
    %v604 = vmul.f32 %v563, %v563
    %v605 = vmul.f32 %v564, %v564
    %v606 = vmul.f32 %v565, %v565
    %v607 = vsel %vm49, %v599, 0.0
    %608 = vadd.xlane.f32.xlu0 %v607
    %v609 = vpop.xlane.xlu0 %608
    %v610 = vsel %vm49, %v600, 0.0
    %611 = vadd.xlane.f32.xlu0 %v610
    %v612 = vpop.xlane.xlu0 %611
    %v613 = vsel %vm49, %v601, 0.0
    %614 = vadd.xlane.f32.xlu0 %v613
    %v615 = vpop.xlane.xlu0 %614
    %v616 = vsel %vm49, %v602, 0.0
    %617 = vadd.xlane.f32.xlu0 %v616
    %v618 = vpop.xlane.xlu0 %617
    %v619 = vsel %vm49, %v603, 0.0
    %620 = vadd.xlane.f32.xlu0 %v619
    %v621 = vpop.xlane.xlu0 %620
    %v622 = vsel %vm49, %v604, 0.0
    %623 = vadd.xlane.f32.xlu0 %v622
    %v624 = vpop.xlane.xlu0 %623
    %v625 = vsel %vm49, %v605, 0.0
    %626 = vadd.xlane.f32.xlu0 %v625
    %v627 = vpop.xlane.xlu0 %626
    %v628 = vsel %vm49, %v606, 0.0
    %629 = vadd.xlane.f32.xlu0 %v628
    %v630 = vpop.xlane.xlu0 %629
    %v631 = vmul.f32 %v609, %v590
    %v632 = vmul.f32 %v612, %v590
    %v633 = vmul.f32 %v615, %v590
    %v634 = vmul.f32 %v618, %v590
    %v635 = vmul.f32 %v621, %v590
    %v636 = vmul.f32 %v624, %v590
    %v637 = vmul.f32 %v627, %v590
    %v638 = vmul.f32 %v630, %v590
    %v639 = vmul.f32 %v591, %v591
    %v640 = vmul.f32 %v592, %v592
    %v641 = vmul.f32 %v593, %v593
    %v642 = vmul.f32 %v594, %v594
    %v643 = vmul.f32 %v595, %v595
    %v644 = vmul.f32 %v596, %v596
    %v645 = vmul.f32 %v597, %v597
    %v646 = vmul.f32 %v598, %v598
    %v647 = vsub.f32 %v631, %v639
    %v648 = vsub.f32 %v632, %v640
    %v649 = vsub.f32 %v633, %v641
    %v650 = vsub.f32 %v634, %v642
    %v651 = vsub.f32 %v635, %v643
    %v652 = vsub.f32 %v636, %v644
    %v653 = vsub.f32 %v637, %v645
    %v654 = vsub.f32 %v638, %v646
    %v655 = vsub.f32 %v558, %v591
    %v656 = vsub.f32 %v559, %v592
    %v657 = vsub.f32 %v560, %v593
    %v658 = vsub.f32 %v561, %v594
    %v659 = vsub.f32 %v562, %v595
    %v660 = vsub.f32 %v563, %v596
    %v661 = vsub.f32 %v564, %v597
    %v662 = vsub.f32 %v565, %v598
    %v663 = vadd.f32 %v647, 1e-05
    %v664 = vadd.f32 %v648, 1e-05
    %v665 = vadd.f32 %v649, 1e-05
    %v666 = vadd.f32 %v650, 1e-05
    %v667 = vadd.f32 %v651, 1e-05
    %v668 = vadd.f32 %v652, 1e-05
    %v669 = vadd.f32 %v653, 1e-05
    %v670 = vadd.f32 %v654, 1e-05
    %v671 = vrsqrt.pop %v663
    %v672 = vrsqrt.pop %v664
    %v673 = vrsqrt.pop %v665
    %v674 = vrsqrt.pop %v666
    %v675 = vrsqrt.pop %v667
    %v676 = vrsqrt.pop %v668
    %v677 = vrsqrt.pop %v669
    %v678 = vrsqrt.pop %v670
    %v679 = vmul.f32 %v655, %v671
    %v680 = vmul.f32 %v656, %v672
    %v681 = vmul.f32 %v657, %v673
    %v682 = vmul.f32 %v658, %v674
    %v683 = vmul.f32 %v659, %v675
    %v684 = vmul.f32 %v660, %v676
    %v685 = vmul.f32 %v661, %v677
    %v686 = vmul.f32 %v662, %v678
    %687 = vrot.lane.b32.xlu0 %v47, 96
    %v688 = vpop.permute.xlu0 %687
    %v690 = vmul.f32 %v679, %v688
    %v691 = vmul.f32 %v680, %v688
    %v692 = vmul.f32 %v681, %v688
    %v693 = vmul.f32 %v682, %v688
    %v694 = vmul.f32 %v683, %v688
    %v695 = vmul.f32 %v684, %v688
    %v696 = vmul.f32 %v685, %v688
    %v697 = vmul.f32 %v686, %v688
    %698 = vrot.lane.b32.xlu0 %v47, 88
    %v699 = vpop.permute.xlu0 %698
    %v701 = vadd.f32 %v690, %v699
    %v702 = vadd.f32 %v691, %v699
    %v703 = vadd.f32 %v692, %v699
    %v704 = vadd.f32 %v693, %v699
    %v705 = vadd.f32 %v694, %v699
    %v706 = vadd.f32 %v695, %v699
    %v707 = vadd.f32 %v696, %v699
    %v708 = vadd.f32 %v697, %v699
    %v709 = vpack.c.bf16 %v702, %v701
    %v710 = vpack.c.bf16 %v704, %v703
    %v711 = vpack.c.bf16 %v706, %v705
    %v712 = vpack.c.bf16 %v708, %v707
    %713 = vrot.lane.b32.xlu0 %v472, 96
    %v714 = vpop.permute.xlu0 %713
    %715 = vrot.lane.b32.xlu0 %v47, 80
    %v716 = vpop.permute.xlu0 %715
    %v719 = vsel %vm49, %v709, 0
    %v722 = vsel %vm49, %v710, 0
    %v725 = vsel %vm49, %v711, 0
    %v728 = vsel %vm49, %v712, 0
    %v731 = vsel %vm62, %v714, 0
    %733 = vmatprep.subr.bf16.mxu0 0
    %734 = vmatpush1.bf16.msra.mxu0 %v731
    %735 = vmatprep.subr.bf16.mxu0 0
    %736 = vmatpush1.bf16.msra.mxu0 0
    %737 = vmatprep.subr.bf16.mxu0 0
    %738 = vmatpush1.bf16.msra.mxu0 0
    %739 = vmatprep.subr.bf16.mxu0 0
    %740 = vmatpush1.bf16.msra.mxu0 0
    %741 = vmatprep.subr.bf16.mxu0 0
    %742 = vmatpush1.bf16.msra.mxu0 0
    %743 = vmatprep.subr.bf16.mxu0 0
    %744 = vmatpush1.bf16.msra.mxu0 0
    %745 = vmatprep.subr.bf16.mxu0 0
    %746 = vmatpush1.bf16.msra.mxu0 0
    %747 = vmatprep.subr.bf16.mxu0 0
    %748 = vmatpush1.bf16.msra.mxu0 0
    %749 = vmatprep.subr.bf16.mxu0 0
    %750 = vmatpush1.bf16.msra.mxu0 0
    %751 = vmatprep.subr.bf16.mxu0 0
    %752 = vmatpush1.bf16.msra.mxu0 0
    %753 = vmatprep.subr.bf16.mxu0 0
    %754 = vmatpush1.bf16.msra.mxu0 0
    %755 = vmatprep.subr.bf16.mxu0 0
    %756 = vmatpush1.bf16.msra.mxu0 0
    %757 = vmatprep.subr.bf16.mxu0 0
    %758 = vmatpush1.bf16.msra.mxu0 0
    %759 = vmatprep.subr.bf16.mxu0 0
    %760 = vmatpush1.bf16.msra.mxu0 0
    %761 = vmatprep.subr.bf16.mxu0 0
    %762 = vmatpush1.bf16.msra.mxu0 0
    %763 = vmatprep.subr.bf16.mxu0 0
    %764 = vmatpush1.bf16.msra.mxu0 0
    %765 = vmatprep.mubr.bf16.mxu0 0
    %766 = vmatmul.mubr.bf16.gmra.mrb[0].mxu0 %v719
    %v767 = vpop.f32.mrb[0].mxu0
    %v768 = vadd.f32 %v716, %v767
    %v769 = vpop.f32.mrb[0].mxu0
    %v770 = vpop.f32.mrb[0].mxu0
    %v771 = vadd.f32 %v716, %v770
    %v772 = vpop.f32.mrb[0].mxu0
    %773 = vmatprep.mubr.bf16.mxu0 0
    %774 = vmatmul.mubr.bf16.gmra.mrb[0].mxu0 %v722
    %v775 = vpop.f32.mrb[0].mxu0
    %v776 = vadd.f32 %v716, %v775
    %v777 = vpop.f32.mrb[0].mxu0
    %v778 = vpop.f32.mrb[0].mxu0
    %v779 = vadd.f32 %v716, %v778
    %v780 = vpop.f32.mrb[0].mxu0
    %781 = vmatprep.mubr.bf16.mxu0 0
    %782 = vmatmul.mubr.bf16.gmra.mrb[0].mxu0 %v725
    %v783 = vpop.f32.mrb[0].mxu0
    %v784 = vadd.f32 %v716, %v783
    %v785 = vpop.f32.mrb[0].mxu0
    %v786 = vpop.f32.mrb[0].mxu0
    %v787 = vadd.f32 %v716, %v786
    %v788 = vpop.f32.mrb[0].mxu0
    %789 = vmatprep.mubr.bf16.mxu0 0
    %790 = vmatmul.mubr.bf16.gmra.mrb[0].mxu0 %v728
    %v791 = vpop.f32.mrb[0].mxu0
    %v792 = vadd.f32 %v716, %v791
    %v793 = vpop.f32.mrb[0].mxu0
    %v794 = vpop.f32.mrb[0].mxu0
    %v795 = vadd.f32 %v716, %v794
    %v796 = vpop.f32.mrb[0].mxu0
    %797 = vdwg.mxu0
    %v798 = vmax.f32 %v768, 0.0
    %v799 = vmax.f32 %v771, 0.0
    %v800 = vmax.f32 %v776, 0.0
    %v801 = vmax.f32 %v779, 0.0
    %v802 = vmax.f32 %v784, 0.0
    %v803 = vmax.f32 %v787, 0.0
    %v804 = vmax.f32 %v792, 0.0
    %v805 = vmax.f32 %v795, 0.0
    %v806 = vpack.c.bf16 %v799, %v798
    %v807 = vpack.c.bf16 %v801, %v800
    %v808 = vpack.c.bf16 %v803, %v802
    %v809 = vpack.c.bf16 %v805, %v804
    %v814 = vunpack.c.l.b16 %v34
    %v815 = vunpack.c.l.b16 %v35
    %v816 = vunpack.c.l.b16 %v36
    %v817 = vunpack.c.l.b16 %v37
    %v818 = vpack.c.b16 %v815, %v814
    %v819 = vpack.c.b16 %v817, %v816
    %822 = vrot.lane.b32.xlu0 %v47, 48
    %v823 = vpop.permute.xlu0 %822
    %vm825 = vcmask 261120
    %v827 = vsel %vm825, %v806, 0
    %v830 = vsel %vm825, %v807, 0
    %v833 = vsel %vm825, %v808, 0
    %v836 = vsel %vm825, %v809, 0
    %838 = vmatprep.subr.bf16.mxu0 0
    %839 = vmatpush1.bf16.msra.mxu0 %v818
    %840 = vmatprep.subr.bf16.mxu0 0
    %841 = vmatpush1.bf16.msra.mxu0 %v819
    %842 = vmatprep.subr.bf16.mxu0 0
    %843 = vmatpush1.bf16.msra.mxu0 0
    %844 = vmatprep.subr.bf16.mxu0 0
    %845 = vmatpush1.bf16.msra.mxu0 0
    %846 = vmatprep.subr.bf16.mxu0 0
    %847 = vmatpush1.bf16.msra.mxu0 0
    %848 = vmatprep.subr.bf16.mxu0 0
    %849 = vmatpush1.bf16.msra.mxu0 0
    %850 = vmatprep.subr.bf16.mxu0 0
    %851 = vmatpush1.bf16.msra.mxu0 0
    %852 = vmatprep.subr.bf16.mxu0 0
    %853 = vmatpush1.bf16.msra.mxu0 0
    %854 = vmatprep.subr.bf16.mxu0 0
    %855 = vmatpush1.bf16.msra.mxu0 0
    %856 = vmatprep.subr.bf16.mxu0 0
    %857 = vmatpush1.bf16.msra.mxu0 0
    %858 = vmatprep.subr.bf16.mxu0 0
    %859 = vmatpush1.bf16.msra.mxu0 0
    %860 = vmatprep.subr.bf16.mxu0 0
    %861 = vmatpush1.bf16.msra.mxu0 0
    %862 = vmatprep.subr.bf16.mxu0 0
    %863 = vmatpush1.bf16.msra.mxu0 0
    %864 = vmatprep.subr.bf16.mxu0 0
    %865 = vmatpush1.bf16.msra.mxu0 0
    %866 = vmatprep.subr.bf16.mxu0 0
    %867 = vmatpush1.bf16.msra.mxu0 0
    %868 = vmatprep.subr.bf16.mxu0 0
    %869 = vmatpush1.bf16.msra.mxu0 0
    %870 = vmatprep.mubr.bf16.mxu0 0
    %871 = vmatmul.mubr.bf16.gmra.mrb[0].mxu0 %v827
    %v872 = vpop.f32.mrb[0].mxu0
    %v873 = vadd.f32 %v823, %v872
    %v874 = vpop.f32.mrb[0].mxu0
    %v875 = vpop.f32.mrb[0].mxu0
    %v876 = vadd.f32 %v823, %v875
    %v877 = vpop.f32.mrb[0].mxu0
    %878 = vmatprep.mubr.bf16.mxu0 0
    %879 = vmatmul.mubr.bf16.gmra.mrb[0].mxu0 %v830
    %v880 = vpop.f32.mrb[0].mxu0
    %v881 = vadd.f32 %v823, %v880
    %v882 = vpop.f32.mrb[0].mxu0
    %v883 = vpop.f32.mrb[0].mxu0
    %v884 = vadd.f32 %v823, %v883
    %v885 = vpop.f32.mrb[0].mxu0
    %886 = vmatprep.mubr.bf16.mxu0 0
    %887 = vmatmul.mubr.bf16.gmra.mrb[0].mxu0 %v833
    %v888 = vpop.f32.mrb[0].mxu0
    %v889 = vadd.f32 %v823, %v888
    %v890 = vpop.f32.mrb[0].mxu0
    %v891 = vpop.f32.mrb[0].mxu0
    %v892 = vadd.f32 %v823, %v891
    %v893 = vpop.f32.mrb[0].mxu0
    %894 = vmatprep.mubr.bf16.mxu0 0
    %895 = vmatmul.mubr.bf16.gmra.mrb[0].mxu0 %v836
    %v896 = vpop.f32.mrb[0].mxu0
    %v897 = vadd.f32 %v823, %v896
    %v898 = vpop.f32.mrb[0].mxu0
    %v899 = vpop.f32.mrb[0].mxu0
    %v900 = vadd.f32 %v823, %v899
    %v901 = vpop.f32.mrb[0].mxu0
    %902 = vdwg.mxu0
    %v903 = vadd.f32 %v701, %v873
    %v904 = vadd.f32 %v702, %v876
    %v905 = vadd.f32 %v703, %v881
    %v906 = vadd.f32 %v704, %v884
    %v907 = vadd.f32 %v705, %v889
    %v908 = vadd.f32 %v706, %v892
    %v909 = vadd.f32 %v707, %v897
    %v910 = vadd.f32 %v708, %v900
    %v911 = vsel %vm49, %v903, 0.0
    %912 = vadd.xlane.f32.xlu0 %v911
    %v913 = vpop.xlane.xlu0 %912
    %v914 = vsel %vm49, %v904, 0.0
    %915 = vadd.xlane.f32.xlu0 %v914
    %v916 = vpop.xlane.xlu0 %915
    %v917 = vsel %vm49, %v905, 0.0
    %918 = vadd.xlane.f32.xlu0 %v917
    %v919 = vpop.xlane.xlu0 %918
    %v920 = vsel %vm49, %v906, 0.0
    %921 = vadd.xlane.f32.xlu0 %v920
    %v922 = vpop.xlane.xlu0 %921
    %v923 = vsel %vm49, %v907, 0.0
    %924 = vadd.xlane.f32.xlu0 %v923
    %v925 = vpop.xlane.xlu0 %924
    %v926 = vsel %vm49, %v908, 0.0
    %927 = vadd.xlane.f32.xlu0 %v926
    %v928 = vpop.xlane.xlu0 %927
    %v929 = vsel %vm49, %v909, 0.0
    %930 = vadd.xlane.f32.xlu0 %v929
    %v931 = vpop.xlane.xlu0 %930
    %v932 = vsel %vm49, %v910, 0.0
    %933 = vadd.xlane.f32.xlu0 %v932
    %v934 = vpop.xlane.xlu0 %933
    %v935 = vmul.f32 %v913, %v590
    %v936 = vmul.f32 %v916, %v590
    %v937 = vmul.f32 %v919, %v590
    %v938 = vmul.f32 %v922, %v590
    %v939 = vmul.f32 %v925, %v590
    %v940 = vmul.f32 %v928, %v590
    %v941 = vmul.f32 %v931, %v590
    %v942 = vmul.f32 %v934, %v590
    %v943 = vmul.f32 %v903, %v903
    %v944 = vmul.f32 %v904, %v904
    %v945 = vmul.f32 %v905, %v905
    %v946 = vmul.f32 %v906, %v906
    %v947 = vmul.f32 %v907, %v907
    %v948 = vmul.f32 %v908, %v908
    %v949 = vmul.f32 %v909, %v909
    %v950 = vmul.f32 %v910, %v910
    %v951 = vsel %vm49, %v943, 0.0
    %952 = vadd.xlane.f32.xlu0 %v951
    %v953 = vpop.xlane.xlu0 %952
    %v954 = vsel %vm49, %v944, 0.0
    %955 = vadd.xlane.f32.xlu0 %v954
    %v956 = vpop.xlane.xlu0 %955
    %v957 = vsel %vm49, %v945, 0.0
    %958 = vadd.xlane.f32.xlu0 %v957
    %v959 = vpop.xlane.xlu0 %958
    %v960 = vsel %vm49, %v946, 0.0
    %961 = vadd.xlane.f32.xlu0 %v960
    %v962 = vpop.xlane.xlu0 %961
    %v963 = vsel %vm49, %v947, 0.0
    %964 = vadd.xlane.f32.xlu0 %v963
    %v965 = vpop.xlane.xlu0 %964
    %v966 = vsel %vm49, %v948, 0.0
    %967 = vadd.xlane.f32.xlu0 %v966
    %v968 = vpop.xlane.xlu0 %967
    %v969 = vsel %vm49, %v949, 0.0
    %970 = vadd.xlane.f32.xlu0 %v969
    %v971 = vpop.xlane.xlu0 %970
    %v972 = vsel %vm49, %v950, 0.0
    %973 = vadd.xlane.f32.xlu0 %v972
    %v974 = vpop.xlane.xlu0 %973
    %v975 = vmul.f32 %v953, %v590
    %v976 = vmul.f32 %v956, %v590
    %v977 = vmul.f32 %v959, %v590
    %v978 = vmul.f32 %v962, %v590
    %v979 = vmul.f32 %v965, %v590
    %v980 = vmul.f32 %v968, %v590
    %v981 = vmul.f32 %v971, %v590
    %v982 = vmul.f32 %v974, %v590
    %v983 = vmul.f32 %v935, %v935
    %v984 = vmul.f32 %v936, %v936
    %v985 = vmul.f32 %v937, %v937
    %v986 = vmul.f32 %v938, %v938
    %v987 = vmul.f32 %v939, %v939
    %v988 = vmul.f32 %v940, %v940
    %v989 = vmul.f32 %v941, %v941
    %v990 = vmul.f32 %v942, %v942
    %v991 = vsub.f32 %v975, %v983
    %v992 = vsub.f32 %v976, %v984
    %v993 = vsub.f32 %v977, %v985
    %v994 = vsub.f32 %v978, %v986
    %v995 = vsub.f32 %v979, %v987
    %v996 = vsub.f32 %v980, %v988
    %v997 = vsub.f32 %v981, %v989
    %v998 = vsub.f32 %v982, %v990
    %v999 = vsub.f32 %v903, %v935
    %v1000 = vsub.f32 %v904, %v936
    %v1001 = vsub.f32 %v905, %v937
    %v1002 = vsub.f32 %v906, %v938
    %v1003 = vsub.f32 %v907, %v939
    %v1004 = vsub.f32 %v908, %v940
    %v1005 = vsub.f32 %v909, %v941
    %v1006 = vsub.f32 %v910, %v942
    %v1007 = vadd.f32 %v991, 1e-05
    %v1008 = vadd.f32 %v992, 1e-05
    %v1009 = vadd.f32 %v993, 1e-05
    %v1010 = vadd.f32 %v994, 1e-05
    %v1011 = vadd.f32 %v995, 1e-05
    %v1012 = vadd.f32 %v996, 1e-05
    %v1013 = vadd.f32 %v997, 1e-05
    %v1014 = vadd.f32 %v998, 1e-05
    %v1015 = vrsqrt.pop %v1007
    %v1016 = vrsqrt.pop %v1008
    %v1017 = vrsqrt.pop %v1009
    %v1018 = vrsqrt.pop %v1010
    %v1019 = vrsqrt.pop %v1011
    %v1020 = vrsqrt.pop %v1012
    %v1021 = vrsqrt.pop %v1013
    %v1022 = vrsqrt.pop %v1014
    %v1023 = vmul.f32 %v999, %v1015
    %v1024 = vmul.f32 %v1000, %v1016
    %v1025 = vmul.f32 %v1001, %v1017
    %v1026 = vmul.f32 %v1002, %v1018
    %v1027 = vmul.f32 %v1003, %v1019
    %v1028 = vmul.f32 %v1004, %v1020
    %v1029 = vmul.f32 %v1005, %v1021
    %v1030 = vmul.f32 %v1006, %v1022
    %v1031 = vmul.f32 %v1023, %v688
    %v1032 = vmul.f32 %v1024, %v688
    %v1033 = vmul.f32 %v1025, %v688
    %v1034 = vmul.f32 %v1026, %v688
    %v1035 = vmul.f32 %v1027, %v688
    %v1036 = vmul.f32 %v1028, %v688
    %v1037 = vmul.f32 %v1029, %v688
    %v1038 = vmul.f32 %v1030, %v688
    %v1039 = vadd.f32 %v1031, %v699
    %v1040 = vadd.f32 %v1032, %v699
    %v1041 = vadd.f32 %v1033, %v699
    %v1042 = vadd.f32 %v1034, %v699
    %v1043 = vadd.f32 %v1035, %v699
    %v1044 = vadd.f32 %v1036, %v699
    %v1045 = vadd.f32 %v1037, %v699
    %v1046 = vadd.f32 %v1038, %v699
    %s1047 = scalar_lea.vmem %s1, 4
    %v1048 = vld [vmem:[%s1047] sm:$0xf]
    %s1049 = scalar_lea.vmem %s2, 16
    %v1050 = vld [vmem:[%s1049] sm:$0xf]
    %v1051 = vld [vmem:[%s1049 + $0x4] sm:$0xf]
    %v1052 = vld [vmem:[%s1049 + $0x8] sm:$0xf]
    %v1053 = vld [vmem:[%s1049 + $0xc] sm:$0xf]
    %s1054 = scalar_lea.vmem %s3, 1
    %v1055 = vld [vmem:[%s1054] sm:$0x1]
    %v1056 = vpack.c.bf16 %v1040, %v1039
    %v1057 = vpack.c.bf16 %v1042, %v1041
    %v1058 = vpack.c.bf16 %v1044, %v1043
    %v1059 = vpack.c.bf16 %v1046, %v1045
    %v1061 = vlaneseq
    %v1062 = vshrl.u32 %v1061, 7
    %v1063 = vsub.s32 0, %v1062
    %v1064 = vrot.slane %v1055, %v1063
    %v1067 = vsel %vm49, %v1056, 0
    %v1070 = vsel %vm49, %v1057, 0
    %v1073 = vsel %vm49, %v1058, 0
    %v1076 = vsel %vm49, %v1059, 0
    %v1079 = vsel %vm62, %v1048, 0
    %1081 = vmatprep.subr.bf16.mxu0 0
    %1082 = vmatpush1.bf16.msra.mxu0 %v1079
    %1083 = vmatprep.subr.bf16.mxu0 0
    %1084 = vmatpush1.bf16.msra.mxu0 0
    %1085 = vmatprep.subr.bf16.mxu0 0
    %1086 = vmatpush1.bf16.msra.mxu0 0
    %1087 = vmatprep.subr.bf16.mxu0 0
    %1088 = vmatpush1.bf16.msra.mxu0 0
    %1089 = vmatprep.subr.bf16.mxu0 0
    %1090 = vmatpush1.bf16.msra.mxu0 0
    %1091 = vmatprep.subr.bf16.mxu0 0
    %1092 = vmatpush1.bf16.msra.mxu0 0
    %1093 = vmatprep.subr.bf16.mxu0 0
    %1094 = vmatpush1.bf16.msra.mxu0 0
    %1095 = vmatprep.subr.bf16.mxu0 0
    %1096 = vmatpush1.bf16.msra.mxu0 0
    %1097 = vmatprep.subr.bf16.mxu0 0
    %1098 = vmatpush1.bf16.msra.mxu0 0
    %1099 = vmatprep.subr.bf16.mxu0 0
    %1100 = vmatpush1.bf16.msra.mxu0 0
    %1101 = vmatprep.subr.bf16.mxu0 0
    %1102 = vmatpush1.bf16.msra.mxu0 0
    %1103 = vmatprep.subr.bf16.mxu0 0
    %1104 = vmatpush1.bf16.msra.mxu0 0
    %1105 = vmatprep.subr.bf16.mxu0 0
    %1106 = vmatpush1.bf16.msra.mxu0 0
    %1107 = vmatprep.subr.bf16.mxu0 0
    %1108 = vmatpush1.bf16.msra.mxu0 0
    %1109 = vmatprep.subr.bf16.mxu0 0
    %1110 = vmatpush1.bf16.msra.mxu0 0
    %1111 = vmatprep.subr.bf16.mxu0 0
    %1112 = vmatpush1.bf16.msra.mxu0 0
    %1113 = vmatprep.mubr.bf16.mxu0 0
    %1114 = vmatmul.mubr.bf16.gmra.mrb[0].mxu0 %v1067
    %v1115 = vpop.f32.mrb[0].mxu0
    %v1116 = vadd.f32 %v1064, %v1115
    %v1117 = vpop.f32.mrb[0].mxu0
    %v1118 = vpop.f32.mrb[0].mxu0
    %v1119 = vadd.f32 %v1064, %v1118
    %v1120 = vpop.f32.mrb[0].mxu0
    %1121 = vmatprep.mubr.bf16.mxu0 0
    %1122 = vmatmul.mubr.bf16.gmra.mrb[0].mxu0 %v1070
    %v1123 = vpop.f32.mrb[0].mxu0
    %v1124 = vadd.f32 %v1064, %v1123
    %v1125 = vpop.f32.mrb[0].mxu0
    %v1126 = vpop.f32.mrb[0].mxu0
    %v1127 = vadd.f32 %v1064, %v1126
    %v1128 = vpop.f32.mrb[0].mxu0
    %1129 = vmatprep.mubr.bf16.mxu0 0
    %1130 = vmatmul.mubr.bf16.gmra.mrb[0].mxu0 %v1073
    %v1131 = vpop.f32.mrb[0].mxu0
    %v1132 = vadd.f32 %v1064, %v1131
    %v1133 = vpop.f32.mrb[0].mxu0
    %v1134 = vpop.f32.mrb[0].mxu0
    %v1135 = vadd.f32 %v1064, %v1134
    %v1136 = vpop.f32.mrb[0].mxu0
    %1137 = vmatprep.mubr.bf16.mxu0 0
    %1138 = vmatmul.mubr.bf16.gmra.mrb[0].mxu0 %v1076
    %v1139 = vpop.f32.mrb[0].mxu0
    %v1140 = vadd.f32 %v1064, %v1139
    %v1141 = vpop.f32.mrb[0].mxu0
    %v1142 = vpop.f32.mrb[0].mxu0
    %v1143 = vadd.f32 %v1064, %v1142
    %v1144 = vpop.f32.mrb[0].mxu0
    %1145 = vdwg.mxu0
    %v1146 = vpack.c.bf16 %v1119, %v1116
    %v1147 = vpack.c.bf16 %v1127, %v1124
    %v1148 = vpack.c.bf16 %v1135, %v1132
    %v1149 = vpack.c.bf16 %v1143, %v1140
    %1154 = vrot.lane.b32.xlu0 %v1146, 120
    %v1155 = vpop.permute.xlu0 %1154
    %1156 = vrot.lane.b32.xlu0 %v1147, 120
    %v1157 = vpop.permute.xlu0 %1156
    %1158 = vrot.lane.b32.xlu0 %v1148, 120
    %v1159 = vpop.permute.xlu0 %1158
    %1160 = vrot.lane.b32.xlu0 %v1149, 120
    %v1161 = vpop.permute.xlu0 %1160
    %v1163 = vsel %vm49, %v1146, 0
    %v1166 = vsel %vm49, %v1147, 0
    %v1169 = vsel %vm49, %v1148, 0
    %v1172 = vsel %vm49, %v1149, 0
    %v1175 = vsel %vm49, %v1155, 0
    %v1178 = vsel %vm49, %v1157, 0
    %v1181 = vsel %vm49, %v1159, 0
    %v1184 = vsel %vm49, %v1161, 0
    %1186 = vmatprep.subr.bf16.mxu0 0
    %1187 = vmatpush1.bf16.xpose.msra.mxu0 %v1175
    %1188 = vmatprep.subr.bf16.mxu0 0
    %1189 = vmatpush1.bf16.xpose.msra.mxu0 %v1178
    %1190 = vmatprep.subr.bf16.mxu0 0
    %1191 = vmatpush1.bf16.xpose.msra.mxu0 %v1181
    %1192 = vmatprep.subr.bf16.mxu0 0
    %1193 = vmatpush1.bf16.xpose.msra.mxu0 %v1184
    %1194 = vmatprep.subr.bf16.mxu0 0
    %1195 = vmatpush1.bf16.xpose.msra.mxu0 0
    %1196 = vmatprep.subr.bf16.mxu0 0
    %1197 = vmatpush1.bf16.xpose.msra.mxu0 0
    %1198 = vmatprep.subr.bf16.mxu0 0
    %1199 = vmatpush1.bf16.xpose.msra.mxu0 0
    %1200 = vmatprep.subr.bf16.mxu0 0
    %1201 = vmatpush1.bf16.xpose.msra.mxu0 0
    %1202 = vmatprep.subr.bf16.mxu0 0
    %1203 = vmatpush1.bf16.xpose.msra.mxu0 0
    %1204 = vmatprep.subr.bf16.mxu0 0
    %1205 = vmatpush1.bf16.xpose.msra.mxu0 0
    %1206 = vmatprep.subr.bf16.mxu0 0
    %1207 = vmatpush1.bf16.xpose.msra.mxu0 0
    %1208 = vmatprep.subr.bf16.mxu0 0
    %1209 = vmatpush1.bf16.xpose.msra.mxu0 0
    %1210 = vmatprep.subr.bf16.mxu0 0
    %1211 = vmatpush1.bf16.xpose.msra.mxu0 0
    %1212 = vmatprep.subr.bf16.mxu0 0
    %1213 = vmatpush1.bf16.xpose.msra.mxu0 0
    %1214 = vmatprep.subr.bf16.mxu0 0
    %1215 = vmatpush1.bf16.xpose.msra.mxu0 0
    %1216 = vmatprep.subr.bf16.mxu0 0
    %1217 = vmatpush1.bf16.xpose.msra.mxu0 0
    %1218 = vmatprep.mubr.bf16.mxu0 0
    %1219 = vmatmul.mubr.bf16.gmra.mrb[0].mxu0 %v1163
    %v1220 = vpop.f32.mrb[0].mxu0
    %v1221 = vadd.f32 0.0, %v1220
    %v1222 = vpop.f32.mrb[0].mxu0
    %v1223 = vpop.f32.mrb[0].mxu0
    %v1224 = vadd.f32 0.0, %v1223
    %v1225 = vpop.f32.mrb[0].mxu0
    %1226 = vmatprep.mubr.bf16.mxu0 0
    %1227 = vmatmul.mubr.bf16.gmra.mrb[0].mxu0 %v1166
    %v1228 = vpop.f32.mrb[0].mxu0
    %v1229 = vadd.f32 0.0, %v1228
    %v1230 = vpop.f32.mrb[0].mxu0
    %v1231 = vpop.f32.mrb[0].mxu0
    %v1232 = vadd.f32 0.0, %v1231
    %v1233 = vpop.f32.mrb[0].mxu0
    %1234 = vmatprep.mubr.bf16.mxu0 0
    %1235 = vmatmul.mubr.bf16.gmra.mrb[0].mxu0 %v1169
    %v1236 = vpop.f32.mrb[0].mxu0
    %v1237 = vadd.f32 0.0, %v1236
    %v1238 = vpop.f32.mrb[0].mxu0
    %v1239 = vpop.f32.mrb[0].mxu0
    %v1240 = vadd.f32 0.0, %v1239
    %v1241 = vpop.f32.mrb[0].mxu0
    %1242 = vmatprep.mubr.bf16.mxu0 0
    %1243 = vmatmul.mubr.bf16.gmra.mrb[0].mxu0 %v1172
    %v1244 = vpop.f32.mrb[0].mxu0
    %v1245 = vadd.f32 0.0, %v1244
    %v1246 = vpop.f32.mrb[0].mxu0
    %v1247 = vpop.f32.mrb[0].mxu0
    %v1248 = vadd.f32 0.0, %v1247
    %v1249 = vpop.f32.mrb[0].mxu0
    %1250 = vdwg.mxu0
    %v1251 = vmul.f32 %v1221, 0.35355338
    %v1252 = vmul.f32 %v1224, 0.35355338
    %v1253 = vmul.f32 %v1229, 0.35355338
    %v1254 = vmul.f32 %v1232, 0.35355338
    %v1255 = vmul.f32 %v1237, 0.35355338
    %v1256 = vmul.f32 %v1240, 0.35355338
    %v1257 = vmul.f32 %v1245, 0.35355338
    %v1258 = vmul.f32 %v1248, 0.35355338
    %v1259 = vadd.f32 %v1251, %v244
    %v1260 = vadd.f32 %v1252, %v245
    %v1261 = vadd.f32 %v1253, %v246
    %v1262 = vadd.f32 %v1254, %v247
    %v1263 = vadd.f32 %v1255, %v248
    %v1264 = vadd.f32 %v1256, %v249
    %v1265 = vadd.f32 %v1257, %v250
    %v1266 = vadd.f32 %v1258, %v251
    %v1267 = vsel %vm260, %v1259, -inf
    %1268 = vmax.xlane.f32.xlu0 %v1267
    %v1269 = vpop.xlane.xlu0 %1268
    %v1270 = vsel %vm260, %v1260, -inf
    %1271 = vmax.xlane.f32.xlu0 %v1270
    %v1272 = vpop.xlane.xlu0 %1271
    %v1273 = vsel %vm260, %v1261, -inf
    %1274 = vmax.xlane.f32.xlu0 %v1273
    %v1275 = vpop.xlane.xlu0 %1274
    %v1276 = vsel %vm260, %v1262, -inf
    %1277 = vmax.xlane.f32.xlu0 %v1276
    %v1278 = vpop.xlane.xlu0 %1277
    %v1279 = vsel %vm260, %v1263, -inf
    %1280 = vmax.xlane.f32.xlu0 %v1279
    %v1281 = vpop.xlane.xlu0 %1280
    %v1282 = vsel %vm260, %v1264, -inf
    %1283 = vmax.xlane.f32.xlu0 %v1282
    %v1284 = vpop.xlane.xlu0 %1283
    %v1285 = vsel %vm260, %v1265, -inf
    %1286 = vmax.xlane.f32.xlu0 %v1285
    %v1287 = vpop.xlane.xlu0 %1286
    %v1288 = vsel %vm260, %v1266, -inf
    %1289 = vmax.xlane.f32.xlu0 %v1288
    %v1290 = vpop.xlane.xlu0 %1289
    %v1291 = vsub.f32 %v1259, %v1269
    %v1292 = vsub.f32 %v1260, %v1272
    %v1293 = vsub.f32 %v1261, %v1275
    %v1294 = vsub.f32 %v1262, %v1278
    %v1295 = vsub.f32 %v1263, %v1281
    %v1296 = vsub.f32 %v1264, %v1284
    %v1297 = vsub.f32 %v1265, %v1287
    %v1298 = vsub.f32 %v1266, %v1290
    %v1299 = vmul.f32 %v1291, 1.442695
    %v1300 = vpow.pop %v1299
    %v1301 = vmul.f32 %v1292, 1.442695
    %v1302 = vpow.pop %v1301
    %v1303 = vmul.f32 %v1293, 1.442695
    %v1304 = vpow.pop %v1303
    %v1305 = vmul.f32 %v1294, 1.442695
    %v1306 = vpow.pop %v1305
    %v1307 = vmul.f32 %v1295, 1.442695
    %v1308 = vpow.pop %v1307
    %v1309 = vmul.f32 %v1296, 1.442695
    %v1310 = vpow.pop %v1309
    %v1311 = vmul.f32 %v1297, 1.442695
    %v1312 = vpow.pop %v1311
    %v1313 = vmul.f32 %v1298, 1.442695
    %v1314 = vpow.pop %v1313
    %v1315 = vsel %vm260, %v1300, 0.0
    %1316 = vadd.xlane.f32.xlu0 %v1315
    %v1317 = vpop.xlane.xlu0 %1316
    %v1318 = vsel %vm260, %v1302, 0.0
    %1319 = vadd.xlane.f32.xlu0 %v1318
    %v1320 = vpop.xlane.xlu0 %1319
    %v1321 = vsel %vm260, %v1304, 0.0
    %1322 = vadd.xlane.f32.xlu0 %v1321
    %v1323 = vpop.xlane.xlu0 %1322
    %v1324 = vsel %vm260, %v1306, 0.0
    %1325 = vadd.xlane.f32.xlu0 %v1324
    %v1326 = vpop.xlane.xlu0 %1325
    %v1327 = vsel %vm260, %v1308, 0.0
    %1328 = vadd.xlane.f32.xlu0 %v1327
    %v1329 = vpop.xlane.xlu0 %1328
    %v1330 = vsel %vm260, %v1310, 0.0
    %1331 = vadd.xlane.f32.xlu0 %v1330
    %v1332 = vpop.xlane.xlu0 %1331
    %v1333 = vsel %vm260, %v1312, 0.0
    %1334 = vadd.xlane.f32.xlu0 %v1333
    %v1335 = vpop.xlane.xlu0 %1334
    %v1336 = vsel %vm260, %v1314, 0.0
    %1337 = vadd.xlane.f32.xlu0 %v1336
    %v1338 = vpop.xlane.xlu0 %1337
    %v1339 = vrcp.pop %v1317
    %v1340 = vrcp.pop %v1320
    %v1341 = vrcp.pop %v1323
    %v1342 = vrcp.pop %v1326
    %v1343 = vrcp.pop %v1329
    %v1344 = vrcp.pop %v1332
    %v1345 = vrcp.pop %v1335
    %v1346 = vrcp.pop %v1338
    %v1347 = vmul.f32 %v1317, %v1339
    %v1348 = vmul.f32 %v1320, %v1340
    %v1349 = vmul.f32 %v1323, %v1341
    %v1350 = vmul.f32 %v1326, %v1342
    %v1351 = vmul.f32 %v1329, %v1343
    %v1352 = vmul.f32 %v1332, %v1344
    %v1353 = vmul.f32 %v1335, %v1345
    %v1354 = vmul.f32 %v1338, %v1346
    %v1355 = vsub.f32 2.0, %v1347
    %v1356 = vsub.f32 2.0, %v1348
    %v1357 = vsub.f32 2.0, %v1349
    %v1358 = vsub.f32 2.0, %v1350
    %v1359 = vsub.f32 2.0, %v1351
    %v1360 = vsub.f32 2.0, %v1352
    %v1361 = vsub.f32 2.0, %v1353
    %v1362 = vsub.f32 2.0, %v1354
    %v1363 = vmul.f32 %v1339, %v1355
    %v1364 = vmul.f32 %v1340, %v1356
    %v1365 = vmul.f32 %v1341, %v1357
    %v1366 = vmul.f32 %v1342, %v1358
    %v1367 = vmul.f32 %v1343, %v1359
    %v1368 = vmul.f32 %v1344, %v1360
    %v1369 = vmul.f32 %v1345, %v1361
    %v1370 = vmul.f32 %v1346, %v1362
    %v1371 = vmul.f32 %v1300, %v1363
    %v1372 = vmul.f32 %v1302, %v1364
    %v1373 = vmul.f32 %v1304, %v1365
    %v1374 = vmul.f32 %v1306, %v1366
    %v1375 = vmul.f32 %v1308, %v1367
    %v1376 = vmul.f32 %v1310, %v1368
    %v1377 = vmul.f32 %v1312, %v1369
    %v1378 = vmul.f32 %v1314, %v1370
    %v1379 = vpack.c.bf16 %v1372, %v1371
    %v1380 = vpack.c.bf16 %v1374, %v1373
    %v1381 = vpack.c.bf16 %v1376, %v1375
    %v1382 = vpack.c.bf16 %v1378, %v1377
    %1383 = vrot.lane.b32.xlu0 %v1146, 112
    %v1384 = vpop.permute.xlu0 %1383
    %1385 = vrot.lane.b32.xlu0 %v1147, 112
    %v1386 = vpop.permute.xlu0 %1385
    %1387 = vrot.lane.b32.xlu0 %v1148, 112
    %v1388 = vpop.permute.xlu0 %1387
    %1389 = vrot.lane.b32.xlu0 %v1149, 112
    %v1390 = vpop.permute.xlu0 %1389
    %v1396 = vsel %vm260, %v1379, 0
    %v1399 = vsel %vm260, %v1380, 0
    %v1402 = vsel %vm260, %v1381, 0
    %v1405 = vsel %vm260, %v1382, 0
    %1407 = vmatprep.subr.bf16.mxu0 0
    %1408 = vmatpush1.bf16.msra.mxu0 %v1384
    %1409 = vmatprep.subr.bf16.mxu0 0
    %1410 = vmatpush1.bf16.msra.mxu0 %v1386
    %1411 = vmatprep.subr.bf16.mxu0 0
    %1412 = vmatpush1.bf16.msra.mxu0 %v1388
    %1413 = vmatprep.subr.bf16.mxu0 0
    %1414 = vmatpush1.bf16.msra.mxu0 %v1390
    %1415 = vmatprep.subr.bf16.mxu0 0
    %1416 = vmatpush1.bf16.msra.mxu0 0
    %1417 = vmatprep.subr.bf16.mxu0 0
    %1418 = vmatpush1.bf16.msra.mxu0 0
    %1419 = vmatprep.subr.bf16.mxu0 0
    %1420 = vmatpush1.bf16.msra.mxu0 0
    %1421 = vmatprep.subr.bf16.mxu0 0
    %1422 = vmatpush1.bf16.msra.mxu0 0
    %1423 = vmatprep.subr.bf16.mxu0 0
    %1424 = vmatpush1.bf16.msra.mxu0 0
    %1425 = vmatprep.subr.bf16.mxu0 0
    %1426 = vmatpush1.bf16.msra.mxu0 0
    %1427 = vmatprep.subr.bf16.mxu0 0
    %1428 = vmatpush1.bf16.msra.mxu0 0
    %1429 = vmatprep.subr.bf16.mxu0 0
    %1430 = vmatpush1.bf16.msra.mxu0 0
    %1431 = vmatprep.subr.bf16.mxu0 0
    %1432 = vmatpush1.bf16.msra.mxu0 0
    %1433 = vmatprep.subr.bf16.mxu0 0
    %1434 = vmatpush1.bf16.msra.mxu0 0
    %1435 = vmatprep.subr.bf16.mxu0 0
    %1436 = vmatpush1.bf16.msra.mxu0 0
    %1437 = vmatprep.subr.bf16.mxu0 0
    %1438 = vmatpush1.bf16.msra.mxu0 0
    %1439 = vmatprep.mubr.bf16.mxu0 0
    %1440 = vmatmul.mubr.bf16.gmra.mrb[0].mxu0 %v1396
    %v1441 = vpop.f32.mrb[0].mxu0
    %v1442 = vadd.f32 0.0, %v1441
    %v1443 = vpop.f32.mrb[0].mxu0
    %v1444 = vpop.f32.mrb[0].mxu0
    %v1445 = vadd.f32 0.0, %v1444
    %v1446 = vpop.f32.mrb[0].mxu0
    %1447 = vmatprep.mubr.bf16.mxu0 0
    %1448 = vmatmul.mubr.bf16.gmra.mrb[0].mxu0 %v1399
    %v1449 = vpop.f32.mrb[0].mxu0
    %v1450 = vadd.f32 0.0, %v1449
    %v1451 = vpop.f32.mrb[0].mxu0
    %v1452 = vpop.f32.mrb[0].mxu0
    %v1453 = vadd.f32 0.0, %v1452
    %v1454 = vpop.f32.mrb[0].mxu0
    %1455 = vmatprep.mubr.bf16.mxu0 0
    %1456 = vmatmul.mubr.bf16.gmra.mrb[0].mxu0 %v1402
    %v1457 = vpop.f32.mrb[0].mxu0
    %v1458 = vadd.f32 0.0, %v1457
    %v1459 = vpop.f32.mrb[0].mxu0
    %v1460 = vpop.f32.mrb[0].mxu0
    %v1461 = vadd.f32 0.0, %v1460
    %v1462 = vpop.f32.mrb[0].mxu0
    %1463 = vmatprep.mubr.bf16.mxu0 0
    %1464 = vmatmul.mubr.bf16.gmra.mrb[0].mxu0 %v1405
    %v1465 = vpop.f32.mrb[0].mxu0
    %v1466 = vadd.f32 0.0, %v1465
    %v1467 = vpop.f32.mrb[0].mxu0
    %v1468 = vpop.f32.mrb[0].mxu0
    %v1469 = vadd.f32 0.0, %v1468
    %v1470 = vpop.f32.mrb[0].mxu0
    %1471 = vdwg.mxu0
    %v1472 = vpack.c.bf16 %v1445, %v1442
    %v1473 = vpack.c.bf16 %v1453, %v1450
    %v1474 = vpack.c.bf16 %v1461, %v1458
    %v1475 = vpack.c.bf16 %v1469, %v1466
    %v1477 = vunpack.c.l.b16 %v1048
    %v1478 = vpack.c.b16 %v1477, %v1477
    %1479 = vrot.lane.b32.xlu0 %v1478, 104
    %v1480 = vpop.permute.xlu0 %1479
    %1481 = vrot.lane.b32.xlu0 %v1064, 104
    %v1482 = vpop.permute.xlu0 %1481
    %v1485 = vsel %vm49, %v1472, 0
    %v1488 = vsel %vm49, %v1473, 0
    %v1491 = vsel %vm49, %v1474, 0
    %v1494 = vsel %vm49, %v1475, 0
    %v1497 = vsel %vm62, %v1480, 0
    %1499 = vmatprep.subr.bf16.mxu0 0
    %1500 = vmatpush1.bf16.msra.mxu0 %v1497
    %1501 = vmatprep.subr.bf16.mxu0 0
    %1502 = vmatpush1.bf16.msra.mxu0 0
    %1503 = vmatprep.subr.bf16.mxu0 0
    %1504 = vmatpush1.bf16.msra.mxu0 0
    %1505 = vmatprep.subr.bf16.mxu0 0
    %1506 = vmatpush1.bf16.msra.mxu0 0
    %1507 = vmatprep.subr.bf16.mxu0 0
    %1508 = vmatpush1.bf16.msra.mxu0 0
    %1509 = vmatprep.subr.bf16.mxu0 0
    %1510 = vmatpush1.bf16.msra.mxu0 0
    %1511 = vmatprep.subr.bf16.mxu0 0
    %1512 = vmatpush1.bf16.msra.mxu0 0
    %1513 = vmatprep.subr.bf16.mxu0 0
    %1514 = vmatpush1.bf16.msra.mxu0 0
    %1515 = vmatprep.subr.bf16.mxu0 0
    %1516 = vmatpush1.bf16.msra.mxu0 0
    %1517 = vmatprep.subr.bf16.mxu0 0
    %1518 = vmatpush1.bf16.msra.mxu0 0
    %1519 = vmatprep.subr.bf16.mxu0 0
    %1520 = vmatpush1.bf16.msra.mxu0 0
    %1521 = vmatprep.subr.bf16.mxu0 0
    %1522 = vmatpush1.bf16.msra.mxu0 0
    %1523 = vmatprep.subr.bf16.mxu0 0
    %1524 = vmatpush1.bf16.msra.mxu0 0
    %1525 = vmatprep.subr.bf16.mxu0 0
    %1526 = vmatpush1.bf16.msra.mxu0 0
    %1527 = vmatprep.subr.bf16.mxu0 0
    %1528 = vmatpush1.bf16.msra.mxu0 0
    %1529 = vmatprep.subr.bf16.mxu0 0
    %1530 = vmatpush1.bf16.msra.mxu0 0
    %1531 = vmatprep.mubr.bf16.mxu0 0
    %1532 = vmatmul.mubr.bf16.gmra.mrb[0].mxu0 %v1485
    %v1533 = vpop.f32.mrb[0].mxu0
    %v1534 = vadd.f32 %v1482, %v1533
    %v1535 = vpop.f32.mrb[0].mxu0
    %v1536 = vpop.f32.mrb[0].mxu0
    %v1537 = vadd.f32 %v1482, %v1536
    %v1538 = vpop.f32.mrb[0].mxu0
    %1539 = vmatprep.mubr.bf16.mxu0 0
    %1540 = vmatmul.mubr.bf16.gmra.mrb[0].mxu0 %v1488
    %v1541 = vpop.f32.mrb[0].mxu0
    %v1542 = vadd.f32 %v1482, %v1541
    %v1543 = vpop.f32.mrb[0].mxu0
    %v1544 = vpop.f32.mrb[0].mxu0
    %v1545 = vadd.f32 %v1482, %v1544
    %v1546 = vpop.f32.mrb[0].mxu0
    %1547 = vmatprep.mubr.bf16.mxu0 0
    %1548 = vmatmul.mubr.bf16.gmra.mrb[0].mxu0 %v1491
    %v1549 = vpop.f32.mrb[0].mxu0
    %v1550 = vadd.f32 %v1482, %v1549
    %v1551 = vpop.f32.mrb[0].mxu0
    %v1552 = vpop.f32.mrb[0].mxu0
    %v1553 = vadd.f32 %v1482, %v1552
    %v1554 = vpop.f32.mrb[0].mxu0
    %1555 = vmatprep.mubr.bf16.mxu0 0
    %1556 = vmatmul.mubr.bf16.gmra.mrb[0].mxu0 %v1494
    %v1557 = vpop.f32.mrb[0].mxu0
    %v1558 = vadd.f32 %v1482, %v1557
    %v1559 = vpop.f32.mrb[0].mxu0
    %v1560 = vpop.f32.mrb[0].mxu0
    %v1561 = vadd.f32 %v1482, %v1560
    %v1562 = vpop.f32.mrb[0].mxu0
    %1563 = vdwg.mxu0
    %v1564 = vadd.f32 %v1039, %v1534
    %v1565 = vadd.f32 %v1040, %v1537
    %v1566 = vadd.f32 %v1041, %v1542
    %v1567 = vadd.f32 %v1042, %v1545
    %v1568 = vadd.f32 %v1043, %v1550
    %v1569 = vadd.f32 %v1044, %v1553
    %v1570 = vadd.f32 %v1045, %v1558
    %v1571 = vadd.f32 %v1046, %v1561
    %v1572 = vsel %vm49, %v1564, 0.0
    %1573 = vadd.xlane.f32.xlu0 %v1572
    %v1574 = vpop.xlane.xlu0 %1573
    %v1575 = vsel %vm49, %v1565, 0.0
    %1576 = vadd.xlane.f32.xlu0 %v1575
    %v1577 = vpop.xlane.xlu0 %1576
    %v1578 = vsel %vm49, %v1566, 0.0
    %1579 = vadd.xlane.f32.xlu0 %v1578
    %v1580 = vpop.xlane.xlu0 %1579
    %v1581 = vsel %vm49, %v1567, 0.0
    %1582 = vadd.xlane.f32.xlu0 %v1581
    %v1583 = vpop.xlane.xlu0 %1582
    %v1584 = vsel %vm49, %v1568, 0.0
    %1585 = vadd.xlane.f32.xlu0 %v1584
    %v1586 = vpop.xlane.xlu0 %1585
    %v1587 = vsel %vm49, %v1569, 0.0
    %1588 = vadd.xlane.f32.xlu0 %v1587
    %v1589 = vpop.xlane.xlu0 %1588
    %v1590 = vsel %vm49, %v1570, 0.0
    %1591 = vadd.xlane.f32.xlu0 %v1590
    %v1592 = vpop.xlane.xlu0 %1591
    %v1593 = vsel %vm49, %v1571, 0.0
    %1594 = vadd.xlane.f32.xlu0 %v1593
    %v1595 = vpop.xlane.xlu0 %1594
    %v1596 = vmul.f32 %v1574, %v590
    %v1597 = vmul.f32 %v1577, %v590
    %v1598 = vmul.f32 %v1580, %v590
    %v1599 = vmul.f32 %v1583, %v590
    %v1600 = vmul.f32 %v1586, %v590
    %v1601 = vmul.f32 %v1589, %v590
    %v1602 = vmul.f32 %v1592, %v590
    %v1603 = vmul.f32 %v1595, %v590
    %v1604 = vmul.f32 %v1564, %v1564
    %v1605 = vmul.f32 %v1565, %v1565
    %v1606 = vmul.f32 %v1566, %v1566
    %v1607 = vmul.f32 %v1567, %v1567
    %v1608 = vmul.f32 %v1568, %v1568
    %v1609 = vmul.f32 %v1569, %v1569
    %v1610 = vmul.f32 %v1570, %v1570
    %v1611 = vmul.f32 %v1571, %v1571
    %v1612 = vsel %vm49, %v1604, 0.0
    %1613 = vadd.xlane.f32.xlu0 %v1612
    %v1614 = vpop.xlane.xlu0 %1613
    %v1615 = vsel %vm49, %v1605, 0.0
    %1616 = vadd.xlane.f32.xlu0 %v1615
    %v1617 = vpop.xlane.xlu0 %1616
    %v1618 = vsel %vm49, %v1606, 0.0
    %1619 = vadd.xlane.f32.xlu0 %v1618
    %v1620 = vpop.xlane.xlu0 %1619
    %v1621 = vsel %vm49, %v1607, 0.0
    %1622 = vadd.xlane.f32.xlu0 %v1621
    %v1623 = vpop.xlane.xlu0 %1622
    %v1624 = vsel %vm49, %v1608, 0.0
    %1625 = vadd.xlane.f32.xlu0 %v1624
    %v1626 = vpop.xlane.xlu0 %1625
    %v1627 = vsel %vm49, %v1609, 0.0
    %1628 = vadd.xlane.f32.xlu0 %v1627
    %v1629 = vpop.xlane.xlu0 %1628
    %v1630 = vsel %vm49, %v1610, 0.0
    %1631 = vadd.xlane.f32.xlu0 %v1630
    %v1632 = vpop.xlane.xlu0 %1631
    %v1633 = vsel %vm49, %v1611, 0.0
    %1634 = vadd.xlane.f32.xlu0 %v1633
    %v1635 = vpop.xlane.xlu0 %1634
    %v1636 = vmul.f32 %v1614, %v590
    %v1637 = vmul.f32 %v1617, %v590
    %v1638 = vmul.f32 %v1620, %v590
    %v1639 = vmul.f32 %v1623, %v590
    %v1640 = vmul.f32 %v1626, %v590
    %v1641 = vmul.f32 %v1629, %v590
    %v1642 = vmul.f32 %v1632, %v590
    %v1643 = vmul.f32 %v1635, %v590
    %v1644 = vmul.f32 %v1596, %v1596
    %v1645 = vmul.f32 %v1597, %v1597
    %v1646 = vmul.f32 %v1598, %v1598
    %v1647 = vmul.f32 %v1599, %v1599
    %v1648 = vmul.f32 %v1600, %v1600
    %v1649 = vmul.f32 %v1601, %v1601
    %v1650 = vmul.f32 %v1602, %v1602
    %v1651 = vmul.f32 %v1603, %v1603
    %v1652 = vsub.f32 %v1636, %v1644
    %v1653 = vsub.f32 %v1637, %v1645
    %v1654 = vsub.f32 %v1638, %v1646
    %v1655 = vsub.f32 %v1639, %v1647
    %v1656 = vsub.f32 %v1640, %v1648
    %v1657 = vsub.f32 %v1641, %v1649
    %v1658 = vsub.f32 %v1642, %v1650
    %v1659 = vsub.f32 %v1643, %v1651
    %v1660 = vsub.f32 %v1564, %v1596
    %v1661 = vsub.f32 %v1565, %v1597
    %v1662 = vsub.f32 %v1566, %v1598
    %v1663 = vsub.f32 %v1567, %v1599
    %v1664 = vsub.f32 %v1568, %v1600
    %v1665 = vsub.f32 %v1569, %v1601
    %v1666 = vsub.f32 %v1570, %v1602
    %v1667 = vsub.f32 %v1571, %v1603
    %v1668 = vadd.f32 %v1652, 1e-05
    %v1669 = vadd.f32 %v1653, 1e-05
    %v1670 = vadd.f32 %v1654, 1e-05
    %v1671 = vadd.f32 %v1655, 1e-05
    %v1672 = vadd.f32 %v1656, 1e-05
    %v1673 = vadd.f32 %v1657, 1e-05
    %v1674 = vadd.f32 %v1658, 1e-05
    %v1675 = vadd.f32 %v1659, 1e-05
    %v1676 = vrsqrt.pop %v1668
    %v1677 = vrsqrt.pop %v1669
    %v1678 = vrsqrt.pop %v1670
    %v1679 = vrsqrt.pop %v1671
    %v1680 = vrsqrt.pop %v1672
    %v1681 = vrsqrt.pop %v1673
    %v1682 = vrsqrt.pop %v1674
    %v1683 = vrsqrt.pop %v1675
    %v1684 = vmul.f32 %v1660, %v1676
    %v1685 = vmul.f32 %v1661, %v1677
    %v1686 = vmul.f32 %v1662, %v1678
    %v1687 = vmul.f32 %v1663, %v1679
    %v1688 = vmul.f32 %v1664, %v1680
    %v1689 = vmul.f32 %v1665, %v1681
    %v1690 = vmul.f32 %v1666, %v1682
    %v1691 = vmul.f32 %v1667, %v1683
    %1692 = vrot.lane.b32.xlu0 %v1064, 96
    %v1693 = vpop.permute.xlu0 %1692
    %v1695 = vmul.f32 %v1684, %v1693
    %v1696 = vmul.f32 %v1685, %v1693
    %v1697 = vmul.f32 %v1686, %v1693
    %v1698 = vmul.f32 %v1687, %v1693
    %v1699 = vmul.f32 %v1688, %v1693
    %v1700 = vmul.f32 %v1689, %v1693
    %v1701 = vmul.f32 %v1690, %v1693
    %v1702 = vmul.f32 %v1691, %v1693
    %1703 = vrot.lane.b32.xlu0 %v1064, 88
    %v1704 = vpop.permute.xlu0 %1703
    %v1706 = vadd.f32 %v1695, %v1704
    %v1707 = vadd.f32 %v1696, %v1704
    %v1708 = vadd.f32 %v1697, %v1704
    %v1709 = vadd.f32 %v1698, %v1704
    %v1710 = vadd.f32 %v1699, %v1704
    %v1711 = vadd.f32 %v1700, %v1704
    %v1712 = vadd.f32 %v1701, %v1704
    %v1713 = vadd.f32 %v1702, %v1704
    %v1714 = vpack.c.bf16 %v1707, %v1706
    %v1715 = vpack.c.bf16 %v1709, %v1708
    %v1716 = vpack.c.bf16 %v1711, %v1710
    %v1717 = vpack.c.bf16 %v1713, %v1712
    %1718 = vrot.lane.b32.xlu0 %v1478, 96
    %v1719 = vpop.permute.xlu0 %1718
    %1720 = vrot.lane.b32.xlu0 %v1064, 80
    %v1721 = vpop.permute.xlu0 %1720
    %v1724 = vsel %vm49, %v1714, 0
    %v1727 = vsel %vm49, %v1715, 0
    %v1730 = vsel %vm49, %v1716, 0
    %v1733 = vsel %vm49, %v1717, 0
    %v1736 = vsel %vm62, %v1719, 0
    %1738 = vmatprep.subr.bf16.mxu0 0
    %1739 = vmatpush1.bf16.msra.mxu0 %v1736
    %1740 = vmatprep.subr.bf16.mxu0 0
    %1741 = vmatpush1.bf16.msra.mxu0 0
    %1742 = vmatprep.subr.bf16.mxu0 0
    %1743 = vmatpush1.bf16.msra.mxu0 0
    %1744 = vmatprep.subr.bf16.mxu0 0
    %1745 = vmatpush1.bf16.msra.mxu0 0
    %1746 = vmatprep.subr.bf16.mxu0 0
    %1747 = vmatpush1.bf16.msra.mxu0 0
    %1748 = vmatprep.subr.bf16.mxu0 0
    %1749 = vmatpush1.bf16.msra.mxu0 0
    %1750 = vmatprep.subr.bf16.mxu0 0
    %1751 = vmatpush1.bf16.msra.mxu0 0
    %1752 = vmatprep.subr.bf16.mxu0 0
    %1753 = vmatpush1.bf16.msra.mxu0 0
    %1754 = vmatprep.subr.bf16.mxu0 0
    %1755 = vmatpush1.bf16.msra.mxu0 0
    %1756 = vmatprep.subr.bf16.mxu0 0
    %1757 = vmatpush1.bf16.msra.mxu0 0
    %1758 = vmatprep.subr.bf16.mxu0 0
    %1759 = vmatpush1.bf16.msra.mxu0 0
    %1760 = vmatprep.subr.bf16.mxu0 0
    %1761 = vmatpush1.bf16.msra.mxu0 0
    %1762 = vmatprep.subr.bf16.mxu0 0
    %1763 = vmatpush1.bf16.msra.mxu0 0
    %1764 = vmatprep.subr.bf16.mxu0 0
    %1765 = vmatpush1.bf16.msra.mxu0 0
    %1766 = vmatprep.subr.bf16.mxu0 0
    %1767 = vmatpush1.bf16.msra.mxu0 0
    %1768 = vmatprep.subr.bf16.mxu0 0
    %1769 = vmatpush1.bf16.msra.mxu0 0
    %1770 = vmatprep.mubr.bf16.mxu0 0
    %1771 = vmatmul.mubr.bf16.gmra.mrb[0].mxu0 %v1724
    %v1772 = vpop.f32.mrb[0].mxu0
    %v1773 = vadd.f32 %v1721, %v1772
    %v1774 = vpop.f32.mrb[0].mxu0
    %v1775 = vpop.f32.mrb[0].mxu0
    %v1776 = vadd.f32 %v1721, %v1775
    %v1777 = vpop.f32.mrb[0].mxu0
    %1778 = vmatprep.mubr.bf16.mxu0 0
    %1779 = vmatmul.mubr.bf16.gmra.mrb[0].mxu0 %v1727
    %v1780 = vpop.f32.mrb[0].mxu0
    %v1781 = vadd.f32 %v1721, %v1780
    %v1782 = vpop.f32.mrb[0].mxu0
    %v1783 = vpop.f32.mrb[0].mxu0
    %v1784 = vadd.f32 %v1721, %v1783
    %v1785 = vpop.f32.mrb[0].mxu0
    %1786 = vmatprep.mubr.bf16.mxu0 0
    %1787 = vmatmul.mubr.bf16.gmra.mrb[0].mxu0 %v1730
    %v1788 = vpop.f32.mrb[0].mxu0
    %v1789 = vadd.f32 %v1721, %v1788
    %v1790 = vpop.f32.mrb[0].mxu0
    %v1791 = vpop.f32.mrb[0].mxu0
    %v1792 = vadd.f32 %v1721, %v1791
    %v1793 = vpop.f32.mrb[0].mxu0
    %1794 = vmatprep.mubr.bf16.mxu0 0
    %1795 = vmatmul.mubr.bf16.gmra.mrb[0].mxu0 %v1733
    %v1796 = vpop.f32.mrb[0].mxu0
    %v1797 = vadd.f32 %v1721, %v1796
    %v1798 = vpop.f32.mrb[0].mxu0
    %v1799 = vpop.f32.mrb[0].mxu0
    %v1800 = vadd.f32 %v1721, %v1799
    %v1801 = vpop.f32.mrb[0].mxu0
    %1802 = vdwg.mxu0
    %v1803 = vmax.f32 %v1773, 0.0
    %v1804 = vmax.f32 %v1776, 0.0
    %v1805 = vmax.f32 %v1781, 0.0
    %v1806 = vmax.f32 %v1784, 0.0
    %v1807 = vmax.f32 %v1789, 0.0
    %v1808 = vmax.f32 %v1792, 0.0
    %v1809 = vmax.f32 %v1797, 0.0
    %v1810 = vmax.f32 %v1800, 0.0
    %v1811 = vpack.c.bf16 %v1804, %v1803
    %v1812 = vpack.c.bf16 %v1806, %v1805
    %v1813 = vpack.c.bf16 %v1808, %v1807
    %v1814 = vpack.c.bf16 %v1810, %v1809
    %v1819 = vunpack.c.l.b16 %v1050
    %v1820 = vunpack.c.l.b16 %v1051
    %v1821 = vunpack.c.l.b16 %v1052
    %v1822 = vunpack.c.l.b16 %v1053
    %v1823 = vpack.c.b16 %v1820, %v1819
    %v1824 = vpack.c.b16 %v1822, %v1821
    %1827 = vrot.lane.b32.xlu0 %v1064, 48
    %v1828 = vpop.permute.xlu0 %1827
    %v1831 = vsel %vm825, %v1811, 0
    %v1834 = vsel %vm825, %v1812, 0
    %v1837 = vsel %vm825, %v1813, 0
    %v1840 = vsel %vm825, %v1814, 0
    %1842 = vmatprep.subr.bf16.mxu0 0
    %1843 = vmatpush1.bf16.msra.mxu0 %v1823
    %1844 = vmatprep.subr.bf16.mxu0 0
    %1845 = vmatpush1.bf16.msra.mxu0 %v1824
    %1846 = vmatprep.subr.bf16.mxu0 0
    %1847 = vmatpush1.bf16.msra.mxu0 0
    %1848 = vmatprep.subr.bf16.mxu0 0
    %1849 = vmatpush1.bf16.msra.mxu0 0
    %1850 = vmatprep.subr.bf16.mxu0 0
    %1851 = vmatpush1.bf16.msra.mxu0 0
    %1852 = vmatprep.subr.bf16.mxu0 0
    %1853 = vmatpush1.bf16.msra.mxu0 0
    %1854 = vmatprep.subr.bf16.mxu0 0
    %1855 = vmatpush1.bf16.msra.mxu0 0
    %1856 = vmatprep.subr.bf16.mxu0 0
    %1857 = vmatpush1.bf16.msra.mxu0 0
    %1858 = vmatprep.subr.bf16.mxu0 0
    %1859 = vmatpush1.bf16.msra.mxu0 0
    %1860 = vmatprep.subr.bf16.mxu0 0
    %1861 = vmatpush1.bf16.msra.mxu0 0
    %1862 = vmatprep.subr.bf16.mxu0 0
    %1863 = vmatpush1.bf16.msra.mxu0 0
    %1864 = vmatprep.subr.bf16.mxu0 0
    %1865 = vmatpush1.bf16.msra.mxu0 0
    %1866 = vmatprep.subr.bf16.mxu0 0
    %1867 = vmatpush1.bf16.msra.mxu0 0
    %1868 = vmatprep.subr.bf16.mxu0 0
    %1869 = vmatpush1.bf16.msra.mxu0 0
    %1870 = vmatprep.subr.bf16.mxu0 0
    %1871 = vmatpush1.bf16.msra.mxu0 0
    %1872 = vmatprep.subr.bf16.mxu0 0
    %1873 = vmatpush1.bf16.msra.mxu0 0
    %1874 = vmatprep.mubr.bf16.mxu0 0
    %1875 = vmatmul.mubr.bf16.gmra.mrb[0].mxu0 %v1831
    %v1876 = vpop.f32.mrb[0].mxu0
    %v1877 = vadd.f32 %v1828, %v1876
    %v1878 = vpop.f32.mrb[0].mxu0
    %v1879 = vpop.f32.mrb[0].mxu0
    %v1880 = vadd.f32 %v1828, %v1879
    %v1881 = vpop.f32.mrb[0].mxu0
    %1882 = vmatprep.mubr.bf16.mxu0 0
    %1883 = vmatmul.mubr.bf16.gmra.mrb[0].mxu0 %v1834
    %v1884 = vpop.f32.mrb[0].mxu0
    %v1885 = vadd.f32 %v1828, %v1884
    %v1886 = vpop.f32.mrb[0].mxu0
    %v1887 = vpop.f32.mrb[0].mxu0
    %v1888 = vadd.f32 %v1828, %v1887
    %v1889 = vpop.f32.mrb[0].mxu0
    %1890 = vmatprep.mubr.bf16.mxu0 0
    %1891 = vmatmul.mubr.bf16.gmra.mrb[0].mxu0 %v1837
    %v1892 = vpop.f32.mrb[0].mxu0
    %v1893 = vadd.f32 %v1828, %v1892
    %v1894 = vpop.f32.mrb[0].mxu0
    %v1895 = vpop.f32.mrb[0].mxu0
    %v1896 = vadd.f32 %v1828, %v1895
    %v1897 = vpop.f32.mrb[0].mxu0
    %1898 = vmatprep.mubr.bf16.mxu0 0
    %1899 = vmatmul.mubr.bf16.gmra.mrb[0].mxu0 %v1840
    %v1900 = vpop.f32.mrb[0].mxu0
    %v1901 = vadd.f32 %v1828, %v1900
    %v1902 = vpop.f32.mrb[0].mxu0
    %v1903 = vpop.f32.mrb[0].mxu0
    %v1904 = vadd.f32 %v1828, %v1903
    %v1905 = vpop.f32.mrb[0].mxu0
    %1906 = vdwg.mxu0
    %v1907 = vadd.f32 %v1706, %v1877
    %v1908 = vadd.f32 %v1707, %v1880
    %v1909 = vadd.f32 %v1708, %v1885
    %v1910 = vadd.f32 %v1709, %v1888
    %v1911 = vadd.f32 %v1710, %v1893
    %v1912 = vadd.f32 %v1711, %v1896
    %v1913 = vadd.f32 %v1712, %v1901
    %v1914 = vadd.f32 %v1713, %v1904
    %v1915 = vsel %vm49, %v1907, 0.0
    %1916 = vadd.xlane.f32.xlu0 %v1915
    %v1917 = vpop.xlane.xlu0 %1916
    %v1918 = vsel %vm49, %v1908, 0.0
    %1919 = vadd.xlane.f32.xlu0 %v1918
    %v1920 = vpop.xlane.xlu0 %1919
    %v1921 = vsel %vm49, %v1909, 0.0
    %1922 = vadd.xlane.f32.xlu0 %v1921
    %v1923 = vpop.xlane.xlu0 %1922
    %v1924 = vsel %vm49, %v1910, 0.0
    %1925 = vadd.xlane.f32.xlu0 %v1924
    %v1926 = vpop.xlane.xlu0 %1925
    %v1927 = vsel %vm49, %v1911, 0.0
    %1928 = vadd.xlane.f32.xlu0 %v1927
    %v1929 = vpop.xlane.xlu0 %1928
    %v1930 = vsel %vm49, %v1912, 0.0
    %1931 = vadd.xlane.f32.xlu0 %v1930
    %v1932 = vpop.xlane.xlu0 %1931
    %v1933 = vsel %vm49, %v1913, 0.0
    %1934 = vadd.xlane.f32.xlu0 %v1933
    %v1935 = vpop.xlane.xlu0 %1934
    %v1936 = vsel %vm49, %v1914, 0.0
    %1937 = vadd.xlane.f32.xlu0 %v1936
    %v1938 = vpop.xlane.xlu0 %1937
    %v1939 = vmul.f32 %v1917, %v590
    %v1940 = vmul.f32 %v1920, %v590
    %v1941 = vmul.f32 %v1923, %v590
    %v1942 = vmul.f32 %v1926, %v590
    %v1943 = vmul.f32 %v1929, %v590
    %v1944 = vmul.f32 %v1932, %v590
    %v1945 = vmul.f32 %v1935, %v590
    %v1946 = vmul.f32 %v1938, %v590
    %v1947 = vmul.f32 %v1907, %v1907
    %v1948 = vmul.f32 %v1908, %v1908
    %v1949 = vmul.f32 %v1909, %v1909
    %v1950 = vmul.f32 %v1910, %v1910
    %v1951 = vmul.f32 %v1911, %v1911
    %v1952 = vmul.f32 %v1912, %v1912
    %v1953 = vmul.f32 %v1913, %v1913
    %v1954 = vmul.f32 %v1914, %v1914
    %v1955 = vsel %vm49, %v1947, 0.0
    %1956 = vadd.xlane.f32.xlu0 %v1955
    %v1957 = vpop.xlane.xlu0 %1956
    %v1958 = vsel %vm49, %v1948, 0.0
    %1959 = vadd.xlane.f32.xlu0 %v1958
    %v1960 = vpop.xlane.xlu0 %1959
    %v1961 = vsel %vm49, %v1949, 0.0
    %1962 = vadd.xlane.f32.xlu0 %v1961
    %v1963 = vpop.xlane.xlu0 %1962
    %v1964 = vsel %vm49, %v1950, 0.0
    %1965 = vadd.xlane.f32.xlu0 %v1964
    %v1966 = vpop.xlane.xlu0 %1965
    %v1967 = vsel %vm49, %v1951, 0.0
    %1968 = vadd.xlane.f32.xlu0 %v1967
    %v1969 = vpop.xlane.xlu0 %1968
    %v1970 = vsel %vm49, %v1952, 0.0
    %1971 = vadd.xlane.f32.xlu0 %v1970
    %v1972 = vpop.xlane.xlu0 %1971
    %v1973 = vsel %vm49, %v1953, 0.0
    %1974 = vadd.xlane.f32.xlu0 %v1973
    %v1975 = vpop.xlane.xlu0 %1974
    %v1976 = vsel %vm49, %v1954, 0.0
    %1977 = vadd.xlane.f32.xlu0 %v1976
    %v1978 = vpop.xlane.xlu0 %1977
    %v1979 = vmul.f32 %v1957, %v590
    %v1980 = vmul.f32 %v1960, %v590
    %v1981 = vmul.f32 %v1963, %v590
    %v1982 = vmul.f32 %v1966, %v590
    %v1983 = vmul.f32 %v1969, %v590
    %v1984 = vmul.f32 %v1972, %v590
    %v1985 = vmul.f32 %v1975, %v590
    %v1986 = vmul.f32 %v1978, %v590
    %v1987 = vmul.f32 %v1939, %v1939
    %v1988 = vmul.f32 %v1940, %v1940
    %v1989 = vmul.f32 %v1941, %v1941
    %v1990 = vmul.f32 %v1942, %v1942
    %v1991 = vmul.f32 %v1943, %v1943
    %v1992 = vmul.f32 %v1944, %v1944
    %v1993 = vmul.f32 %v1945, %v1945
    %v1994 = vmul.f32 %v1946, %v1946
    %v1995 = vsub.f32 %v1979, %v1987
    %v1996 = vsub.f32 %v1980, %v1988
    %v1997 = vsub.f32 %v1981, %v1989
    %v1998 = vsub.f32 %v1982, %v1990
    %v1999 = vsub.f32 %v1983, %v1991
    %v2000 = vsub.f32 %v1984, %v1992
    %v2001 = vsub.f32 %v1985, %v1993
    %v2002 = vsub.f32 %v1986, %v1994
    %v2003 = vsub.f32 %v1907, %v1939
    %v2004 = vsub.f32 %v1908, %v1940
    %v2005 = vsub.f32 %v1909, %v1941
    %v2006 = vsub.f32 %v1910, %v1942
    %v2007 = vsub.f32 %v1911, %v1943
    %v2008 = vsub.f32 %v1912, %v1944
    %v2009 = vsub.f32 %v1913, %v1945
    %v2010 = vsub.f32 %v1914, %v1946
    %v2011 = vadd.f32 %v1995, 1e-05
    %v2012 = vadd.f32 %v1996, 1e-05
    %v2013 = vadd.f32 %v1997, 1e-05
    %v2014 = vadd.f32 %v1998, 1e-05
    %v2015 = vadd.f32 %v1999, 1e-05
    %v2016 = vadd.f32 %v2000, 1e-05
    %v2017 = vadd.f32 %v2001, 1e-05
    %v2018 = vadd.f32 %v2002, 1e-05
    %v2019 = vrsqrt.pop %v2011
    %v2020 = vrsqrt.pop %v2012
    %v2021 = vrsqrt.pop %v2013
    %v2022 = vrsqrt.pop %v2014
    %v2023 = vrsqrt.pop %v2015
    %v2024 = vrsqrt.pop %v2016
    %v2025 = vrsqrt.pop %v2017
    %v2026 = vrsqrt.pop %v2018
    %v2027 = vmul.f32 %v2003, %v2019
    %v2028 = vmul.f32 %v2004, %v2020
    %v2029 = vmul.f32 %v2005, %v2021
    %v2030 = vmul.f32 %v2006, %v2022
    %v2031 = vmul.f32 %v2007, %v2023
    %v2032 = vmul.f32 %v2008, %v2024
    %v2033 = vmul.f32 %v2009, %v2025
    %v2034 = vmul.f32 %v2010, %v2026
    %v2035 = vmul.f32 %v2027, %v1693
    %v2036 = vmul.f32 %v2028, %v1693
    %v2037 = vmul.f32 %v2029, %v1693
    %v2038 = vmul.f32 %v2030, %v1693
    %v2039 = vmul.f32 %v2031, %v1693
    %v2040 = vmul.f32 %v2032, %v1693
    %v2041 = vmul.f32 %v2033, %v1693
    %v2042 = vmul.f32 %v2034, %v1693
    %v2043 = vadd.f32 %v2035, %v1704
    %v2044 = vadd.f32 %v2036, %v1704
    %v2045 = vadd.f32 %v2037, %v1704
    %v2046 = vadd.f32 %v2038, %v1704
    %v2047 = vadd.f32 %v2039, %v1704
    %v2048 = vadd.f32 %v2040, %v1704
    %v2049 = vadd.f32 %v2041, %v1704
    %v2050 = vadd.f32 %v2042, %v1704
    %v2051 = vld [vmem:[%s4 + $0x40] sm:$0xf]
    %v2053 = vsel %vm260, %v2051, 0
    %2055 = vmatprep.subr.mxu0 0.0
    %2056 = vmatpush1.msra.mxu0 %v2043
    %2057 = vmatprep.subr.mxu0 0.0
    %2058 = vmatpush1.msra.mxu0 %v2044
    %2059 = vmatprep.subr.mxu0 0.0
    %2060 = vmatpush1.msra.mxu0 %v2045
    %2061 = vmatprep.subr.mxu0 0.0
    %2062 = vmatpush1.msra.mxu0 %v2046
    %2063 = vmatprep.subr.mxu0 0.0
    %2064 = vmatpush1.msra.mxu0 %v2047
    %2065 = vmatprep.subr.mxu0 0.0
    %2066 = vmatpush1.msra.mxu0 %v2048
    %2067 = vmatprep.subr.mxu0 0.0
    %2068 = vmatpush1.msra.mxu0 %v2049
    %2069 = vmatprep.subr.mxu0 0.0
    %2070 = vmatpush1.msra.mxu0 %v2050
    %2071 = vmatprep.subr.mxu0 0.0
    %2072 = vmatpush1.msra.mxu0 0.0
    %2073 = vmatprep.subr.mxu0 0.0
    %2074 = vmatpush1.msra.mxu0 0.0
    %2075 = vmatprep.subr.mxu0 0.0
    %2076 = vmatpush1.msra.mxu0 0.0
    %2077 = vmatprep.subr.mxu0 0.0
    %2078 = vmatpush1.msra.mxu0 0.0
    %2079 = vmatprep.subr.mxu0 0.0
    %2080 = vmatpush1.msra.mxu0 0.0
    %2081 = vmatprep.subr.mxu0 0.0
    %2082 = vmatpush1.msra.mxu0 0.0
    %2083 = vmatprep.subr.mxu0 0.0
    %2084 = vmatpush1.msra.mxu0 0.0
    %2085 = vmatprep.subr.mxu0 0.0
    %2086 = vmatpush1.msra.mxu0 0.0
    %2087 = vmatprep.subr.mxu0 0.0
    %2088 = vmatpush1.msra.mxu0 0.0
    %2089 = vmatprep.subr.mxu0 0.0
    %2090 = vmatpush1.msra.mxu0 0.0
    %2091 = vmatprep.subr.mxu0 0.0
    %2092 = vmatpush1.msra.mxu0 0.0
    %2093 = vmatprep.subr.mxu0 0.0
    %2094 = vmatpush1.msra.mxu0 0.0
    %2095 = vmatprep.subr.mxu0 0.0
    %2096 = vmatpush1.msra.mxu0 0.0
    %2097 = vmatprep.subr.mxu0 0.0
    %2098 = vmatpush1.msra.mxu0 0.0
    %2099 = vmatprep.subr.mxu0 0.0
    %2100 = vmatpush1.msra.mxu0 0.0
    %2101 = vmatprep.subr.mxu0 0.0
    %2102 = vmatpush1.msra.mxu0 0.0
    %2103 = vmatprep.subr.mxu0 0.0
    %2104 = vmatpush1.msra.mxu0 0.0
    %2105 = vmatprep.subr.mxu0 0.0
    %2106 = vmatpush1.msra.mxu0 0.0
    %2107 = vmatprep.subr.mxu0 0.0
    %2108 = vmatpush1.msra.mxu0 0.0
    %2109 = vmatprep.subr.mxu0 0.0
    %2110 = vmatpush1.msra.mxu0 0.0
    %2111 = vmatprep.subr.mxu0 0.0
    %2112 = vmatpush1.msra.mxu0 0.0
    %2113 = vmatprep.subr.mxu0 0.0
    %2114 = vmatpush1.msra.mxu0 0.0
    %2115 = vmatprep.subr.mxu0 0.0
    %2116 = vmatpush1.msra.mxu0 0.0
    %2117 = vmatprep.subr.mxu0 0.0
    %2118 = vmatpush1.msra.mxu0 0.0
    %2119 = vmatprep.mubr.f32.mxu0 0.0
    %2120 = vmatmul.mubr.f32.gmra.mrb[0].mxu0 %v2053
    %v2121 = vpop.f32.mrb[0].mxu0
    %v2122 = vadd.f32 0.0, %v2121
    %v2123 = vpop.f32.mrb[0].mxu0
    %2124 = vdwg.mxu0
    %v2125 = vld [vmem:[%s5] sm:$0xff]
    %v2126 = vld [vmem:[%s5 + $0x8] sm:$0x1]
    %v2127 = vlaneseq
    %v2128 = vshrl.u32 %v2127, 7
    %v2129 = vsub.s32 0, %v2128
    %v2130 = vrot.slane %v2126, %v2129
    %v2132 = vsel %vm49, %v2122, 0
    %2134 = vmatprep.subr.mxu0 0.0
    %2135 = vmatpush1.msra.mxu0 %v2125
    %2136 = vmatprep.subr.mxu0 0.0
    %2137 = vmatpush1.msra.mxu0 0.0
    %2138 = vmatprep.subr.mxu0 0.0
    %2139 = vmatpush1.msra.mxu0 0.0
    %2140 = vmatprep.subr.mxu0 0.0
    %2141 = vmatpush1.msra.mxu0 0.0
    %2142 = vmatprep.subr.mxu0 0.0
    %2143 = vmatpush1.msra.mxu0 0.0
    %2144 = vmatprep.subr.mxu0 0.0
    %2145 = vmatpush1.msra.mxu0 0.0
    %2146 = vmatprep.subr.mxu0 0.0
    %2147 = vmatpush1.msra.mxu0 0.0
    %2148 = vmatprep.subr.mxu0 0.0
    %2149 = vmatpush1.msra.mxu0 0.0
    %2150 = vmatprep.subr.mxu0 0.0
    %2151 = vmatpush1.msra.mxu0 0.0
    %2152 = vmatprep.subr.mxu0 0.0
    %2153 = vmatpush1.msra.mxu0 0.0
    %2154 = vmatprep.subr.mxu0 0.0
    %2155 = vmatpush1.msra.mxu0 0.0
    %2156 = vmatprep.subr.mxu0 0.0
    %2157 = vmatpush1.msra.mxu0 0.0
    %2158 = vmatprep.subr.mxu0 0.0
    %2159 = vmatpush1.msra.mxu0 0.0
    %2160 = vmatprep.subr.mxu0 0.0
    %2161 = vmatpush1.msra.mxu0 0.0
    %2162 = vmatprep.subr.mxu0 0.0
    %2163 = vmatpush1.msra.mxu0 0.0
    %2164 = vmatprep.subr.mxu0 0.0
    %2165 = vmatpush1.msra.mxu0 0.0
    %2166 = vmatprep.subr.mxu0 0.0
    %2167 = vmatpush1.msra.mxu0 0.0
    %2168 = vmatprep.subr.mxu0 0.0
    %2169 = vmatpush1.msra.mxu0 0.0
    %2170 = vmatprep.subr.mxu0 0.0
    %2171 = vmatpush1.msra.mxu0 0.0
    %2172 = vmatprep.subr.mxu0 0.0
    %2173 = vmatpush1.msra.mxu0 0.0
    %2174 = vmatprep.subr.mxu0 0.0
    %2175 = vmatpush1.msra.mxu0 0.0
    %2176 = vmatprep.subr.mxu0 0.0
    %2177 = vmatpush1.msra.mxu0 0.0
    %2178 = vmatprep.subr.mxu0 0.0
    %2179 = vmatpush1.msra.mxu0 0.0
    %2180 = vmatprep.subr.mxu0 0.0
    %2181 = vmatpush1.msra.mxu0 0.0
    %2182 = vmatprep.subr.mxu0 0.0
    %2183 = vmatpush1.msra.mxu0 0.0
    %2184 = vmatprep.subr.mxu0 0.0
    %2185 = vmatpush1.msra.mxu0 0.0
    %2186 = vmatprep.subr.mxu0 0.0
    %2187 = vmatpush1.msra.mxu0 0.0
    %2188 = vmatprep.subr.mxu0 0.0
    %2189 = vmatpush1.msra.mxu0 0.0
    %2190 = vmatprep.subr.mxu0 0.0
    %2191 = vmatpush1.msra.mxu0 0.0
    %2192 = vmatprep.subr.mxu0 0.0
    %2193 = vmatpush1.msra.mxu0 0.0
    %2194 = vmatprep.subr.mxu0 0.0
    %2195 = vmatpush1.msra.mxu0 0.0
    %2196 = vmatprep.subr.mxu0 0.0
    %2197 = vmatpush1.msra.mxu0 0.0
    %2198 = vmatprep.mubr.f32.mxu0 0.0
    %2199 = vmatmul.mubr.f32.gmra.mrb[0].mxu0 %v2132
    %v2200 = vpop.f32.mrb[0].mxu0
    %v2201 = vadd.f32 %v2130, %v2200
    %v2202 = vpop.f32.mrb[0].mxu0
    %2203 = vdwg.mxu0
    %vm2204 = vcmask 35840
    %2205 = vst.msk [vmem:[#allocation2] sm:$0xf] %vm2204, %v2201
    // Predicated region
    $region26: #{transformer_network_forward.1} parent=1 // pred_check
      _
    $region27: #{transformer_network_forward.1} parent=1 // pred_check_branch
      %2207 = sbr.rel (0) target = $region29
    $region28: #{transformer_network_forward.1} parent=1 // pred_region
      %s2209 = ssub.s32 64, 64
      %2210 = vsyncadd [#allocation3], %s2209
      %s2212 = sshll.u32 [#allocation2], 4
      %s2213 = int_to_ptr.vmem [resolvable:$true] %s2212
      %2215 = dma.vmem_to_hbm [thread:$0]  %s2213, 64, %s6, [#allocation3]
    $region29: #{transformer_network_forward.1} parent=1 // pred_fallthru
      _
    // Predicated region
    $region30: #{transformer_network_forward.1} parent=1 // pred_check
      _
    $region31: #{transformer_network_forward.1} parent=1 // pred_check_branch
      %2217 = sbr.rel (0) target = $region33
    $region32: #{transformer_network_forward.1} parent=1 // pred_region
      %2218 = dma.done [#allocation3], 64
    $region33: #{transformer_network_forward.1} parent=1 // pred_fallthru
      _
    %2219 = vsyncpa [#allocation3], 1

</llo_original>
